<compile_context>
chip_gen: v6e
topology: v6e:2x2x1
jax: 0.10.0
libtpu: 0.0.40
codegen_flags: <defaults>
</compile_context>

<pallas_src>
import functools
import math

import jax
import jax.numpy as jnp
from jax.experimental import pallas as pl
from jax.experimental.pallas import tpu as pltpu


def _round_up(x, m):
    return ((x + m - 1) // m) * m


def _vmem_capacity_bytes():
    try:
        return int(pltpu.get_tpu_info().vmem_capacity_bytes)
    except Exception:
        return 128 << 20  # conservative fallback (v5e/v6e size)


def _choose_pack(d_template, d_pair, elt, max_pack=4, max_weight_bytes=2 << 20):
    """Row-packing factor: make Nf = pack*d_pair (and ideally Kf = pack*d_template)
    multiples of 128 so both the output stores and the MXU contraction are
    lane-dense.  Capped so the block-diagonal weight stays small."""
    need_n = 128 // math.gcd(128, d_pair)       # Nf % 128 == 0
    need_k = 128 // math.gcd(128, d_template)   # Kf % 128 == 0
    lcm_nk = need_n * need_k // math.gcd(need_n, need_k)
    for pack in (lcm_nk, need_n, 1):
        if pack > max_pack:
            continue
        if (pack * d_template) * (pack * d_pair) * elt <= max_weight_bytes:
            return pack
    return 1


def _template_projection_kernel(t_ref, w_ref, b_ref, o_ref, *, precision):
    # t_ref : (tm, Kf)   lane-packed input rows
    # w_ref : (Kf, Nf)   block-diagonal kron(I_pack, W^T)  (grid-invariant)
    # b_ref : (1, Nf)    bias tiled `pack` times            (grid-invariant)
    # o_ref : (tm, Nf)   lane-dense output tile
    t_act = jnp.maximum(t_ref[...], 0.0)                       # ReLU on VPU
    acc = jnp.dot(t_act, w_ref[...],
                  preferred_element_type=jnp.float32,
                  precision=precision)                          # MXU, f32 accum
    acc = acc + b_ref[...].astype(jnp.float32)
    o_ref[...] = acc.astype(o_ref.dtype)


def template_projection(t, z, weight, bias, *, tm=None):
    """Pallas implementation of TemplateProjection.forward.

    t      : [..., d_template] or None
    z      : [..., d_pair] (used only for shape/dtype when t is None)
    weight : (d_pair, d_template)   -- torch nn.Linear.weight layout
    bias   : (d_pair,)
    tm     : packed rows per grid step (None -> dtype-dependent default)
    """
    d_pair, d_template = weight.shape
    if t is None:
        # TODO(synk): torch's None path builds zeros with last dim d_pair and
        # feeds them through Linear(d_template, d_pair); that only type-checks
        # when d_template == d_pair, so we mirror it with a d_template-wide
        # zero tensor (output is then just the broadcast bias).
        t = jnp.zeros(z.shape[:-1] + (d_template,), dtype=z.dtype)

    lead_shape = t.shape[:-1]
    M = math.prod(lead_shape) if lead_shape else 1
    dtype = t.dtype
    elt = jnp.dtype(dtype).itemsize

    # ---- lane / contraction packing -----------------------------------------
    pack = _choose_pack(d_template, d_pair, elt)
    Kf = pack * d_template
    Nf = pack * d_pair

    # ---- pad rows only up to the next multiple of `pack` (<= pack-1 rows) ----
    M_pad = _round_up(M, pack)
    Mf = M_pad // pack
    t2 = t.reshape(M, d_template)
    if M_pad != M:
        t2 = jnp.pad(t2, ((0, M_pad - M), (0, 0)))
    t_packed = t2.reshape(Mf, Kf)               # row-major reshape: free view

    # ---- block-diagonal weight = kron(I_pack, W^T), tiled bias ---------------
    w_t = weight.T.astype(dtype)                # (d_template, d_pair)
    if pack > 1:
        w_bd = jnp.kron(jnp.eye(pack, dtype=dtype), w_t)          # (Kf, Nf)
        b2 = jnp.tile(bias.astype(dtype), pack).reshape(1, Nf)
    else:
        w_bd = w_t
        b2 = bias.astype(dtype).reshape(1, Nf)

    # ---- row tile: big tiles, generation-aware VMEM cap ----------------------
    row_align = 8 if elt >= 4 else 16
    if tm is None:
        tm = 16384 if elt <= 2 else 8192        # packed rows per grid step
    vmem_cap = _vmem_capacity_bytes()
    wb_bytes = (Kf * Nf + Nf) * elt
    per_row = (Kf + Nf) * elt                   # in + out bytes per packed row
    budget = int(vmem_cap * 0.65) - 2 * wb_bytes - (4 << 20)
    tm_cap = max(row_align, (budget // (2 * per_row)) // row_align * row_align)
    tm = max(row_align, min(tm, tm_cap))
    tm = min(tm, _round_up(Mf, row_align))
    tm = _round_up(tm, row_align)

    grid_steps = pl.cdiv(Mf, tm)
    # v7x megacore: keep >= 2 steps on the "parallel" axis when there is work.
    if grid_steps == 1 and Mf > row_align:
        tm = _round_up(pl.cdiv(Mf, 2), row_align)
        grid_steps = pl.cdiv(Mf, tm)

    # ---- VMEM limit + cost hint ----------------------------------------------
    vmem_limit = 2 * tm * per_row + 2 * wb_bytes + (4 << 20)
    vmem_limit = int(min(max(vmem_limit, 16 << 20), int(vmem_cap * 0.9)))
    cost = pl.CostEstimate(
        flops=2 * M * d_template * d_pair + M * d_pair,
        transcendentals=0,
        bytes_accessed=(M * d_template + d_template * d_pair + d_pair
                        + M * d_pair) * elt,
    )

    out_shape = jax.ShapeDtypeStruct((Mf, Nf), dtype)
    in_spec_t = pl.BlockSpec((tm, Kf), lambda i: (i, 0))
    out_spec = pl.BlockSpec((tm, Nf), lambda i: (i, 0))

    def _call(invariant_spec_kwargs, precision):
        kernel = functools.partial(_template_projection_kernel,
                                   precision=precision)
        in_specs = [
            in_spec_t,
            pl.BlockSpec((Kf, Nf), lambda i: (0, 0), **invariant_spec_kwargs),
            pl.BlockSpec((1, Nf), lambda i: (0, 0), **invariant_spec_kwargs),
        ]
        return pl.pallas_call(
            kernel,
            out_shape=out_shape,
            grid_spec=pltpu.PrefetchScalarGridSpec(
                num_scalar_prefetch=0,
                grid=(grid_steps,),
                in_specs=in_specs,
                out_specs=out_spec,
            ),
            compiler_params=pltpu.CompilerParams(
                dimension_semantics=("parallel",),
                vmem_limit_bytes=vmem_limit,
            ),
            cost_estimate=cost,
        )(t_packed, w_bd, b2)

    precision = jax.lax.Precision.HIGHEST if dtype == jnp.float32 else None
    try:
        # Grid-invariant weight/bias: single-buffer them to save VMEM.
        out = _call(dict(pipeline_mode=pl.Buffered(1)), precision)
    except Exception:
        # Conservative fallback: default double-buffering / default precision.
        out = _call({}, None)

    out = out.reshape(M_pad, d_pair)
    if M_pad != M:
        out = out[:M]
    return out.reshape(lead_shape + (d_pair,))


def _reference(t, weight, bias):
    t_act = jnp.maximum(t, 0.0)
    return jnp.einsum("...k,pk->...p", t_act, weight) + bias


if __name__ == "__main__":
    d_template = 32
    d_pair = 64

    key = jax.random.PRNGKey(0)
    k_t, k_w, k_b, k_z, k_t2 = jax.random.split(key, 5)

    # Deterministic synthetic params (relu-style scaled init, like init='relu').
    scale = (2.0 / d_template) ** 0.5
    weight = scale * jax.random.normal(k_w, (d_pair, d_template), jnp.float32)
    bias = 0.01 * jax.random.normal(k_b, (d_pair,), jnp.float32)

    # Case 1: batch=2, n_res=8 -> M=128 rows, f32 I/O.
    t = jax.random.normal(k_t, (2, 8, 8, d_template), jnp.float32)
    z = jax.random.normal(k_z, (2, 8, 8, d_pair), jnp.float32)
    out = template_projection(t, z, weight, bias)
    jax.block_until_ready(out)
    ref = _reference(t, weight, bias)
    assert out.shape == (2, 8, 8, d_pair)
    assert jnp.allclose(out, ref, atol=1e-4, rtol=1e-4), "f32 mismatch"

    # Case 2: ragged row count (n_res=7 -> M=98) exercises the partial block
    # and the <=pack-1 row pad.
    t_odd = jax.random.normal(k_t2, (2, 7, 7, d_template), jnp.float32)
    out_odd = template_projection(t_odd, None, weight, bias)
    jax.block_until_ready(out_odd)
    ref_odd = _reference(t_odd, weight, bias)
    assert out_odd.shape == (2, 7, 7, d_pair)
    assert jnp.allclose(out_odd, ref_odd, atol=1e-4, rtol=1e-4), "padded mismatch"

    # Case 3: bf16 I/O (halves HBM traffic; f32 accumulation stays in-kernel).
    t_bf = t.astype(jnp.bfloat16)
    w_bf = weight.astype(jnp.bfloat16)
    b_bf = bias.astype(jnp.bfloat16)
    out_bf = template_projection(t_bf, None, w_bf, b_bf)
    jax.block_until_ready(out_bf)
    ref_bf = _reference(t_bf.astype(jnp.float32),
                        w_bf.astype(jnp.float32),
                        b_bf.astype(jnp.float32))
    assert out_bf.dtype == jnp.bfloat16
    assert jnp.allclose(out_bf.astype(jnp.float32), ref_bf,
                        atol=1e-1, rtol=1e-1), "bf16 mismatch"

    # Case 4: t is None -> zeros through ReLU + Linear == broadcast bias.
    out_none = template_projection(None, z, weight, bias)
    jax.block_until_ready(out_none)
    ref_none = _reference(jnp.zeros(z.shape[:-1] + (d_template,), z.dtype),
                          weight, bias)
    assert out_none.shape == (2, 8, 8, d_pair)
    assert jnp.allclose(out_none, ref_none, atol=1e-5, rtol=1e-5), "None-path mismatch"

    print("KERNEL_OK")
</pallas_src>

<mosaic_0001>
module attributes {stable_mosaic.version = 11 : i64} {
  func.func @_template_projection_kernel(%arg0: i32, %arg1: memref<16x128xf32, #tpu.memory_space<vmem>>, %arg2: memref<128x256xf32, #tpu.memory_space<vmem>>, %arg3: memref<1x256xf32, #tpu.memory_space<vmem>>, %arg4: memref<16x256xf32, #tpu.memory_space<vmem>>) attributes {dimension_semantics = [#tpu.dimension_semantics<parallel>], iteration_bounds = array<i64: 2>, scalar_prefetch = 0 : i64, scratch_operands = 0 : i64, tpu.core_type = #tpu.core_type<tc>, window_params = [{transform_indices = @transform_0, window_bounds = array<i64: 16, 128>}, {pipeline_mode = #tpu.pipeline_mode<synchronous>, transform_indices = @transform_1, window_bounds = array<i64: 128, 256>}, {pipeline_mode = #tpu.pipeline_mode<synchronous>, transform_indices = @transform_2, window_bounds = array<i64: 1, 256>}, {transform_indices = @transform_3, window_bounds = array<i64: 16, 256>}]} {
    %c0 = arith.constant 0 : index
    %c0_0 = arith.constant 0 : index
    %0 = vector.load %arg1[%c0, %c0_0] : memref<16x128xf32, #tpu.memory_space<vmem>>, vector<16x128xf32>
    %cst = arith.constant 0.000000e+00 : f32
    %1 = vector.broadcast %cst : f32 to vector<16x128xf32>
    %2 = arith.maximumf %0, %1 : vector<16x128xf32>
    %c0_1 = arith.constant 0 : index
    %c0_2 = arith.constant 0 : index
    %3 = vector.load %arg2[%c0_1, %c0_2] : memref<128x256xf32, #tpu.memory_space<vmem>>, vector<128x256xf32>
    %cst_3 = arith.constant dense<0.000000e+00> : vector<16x256xf32>
    %4 = tpu.matmul %2, %3, %cst_3 {dimension_numbers = #tpu.dot_dimension_numbers<[1], [0], [0], [1], [0, 0, 1, 1], [], []>, precision = #tpu.contract_precision<fp32>} : vector<16x128xf32>, vector<128x256xf32>, vector<16x256xf32> -> vector<16x256xf32>
    %c0_4 = arith.constant 0 : index
    %c0_5 = arith.constant 0 : index
    %5 = vector.load %arg3[%c0_4, %c0_5] : memref<1x256xf32, #tpu.memory_space<vmem>>, vector<1x256xf32>
    %6 = vector.broadcast %5 : vector<1x256xf32> to vector<16x256xf32>
    %7 = arith.addf %4, %6 : vector<16x256xf32>
    %c0_6 = arith.constant 0 : index
    %c0_7 = arith.constant 0 : index
    %8 = vector.load %arg4[%c0_6, %c0_7] : memref<16x256xf32, #tpu.memory_space<vmem>>, vector<16x256xf32>
    tpu.vector_store %arg4[%c0_6, %c0_7], %7 {strides = array<i32>} : memref<16x256xf32, #tpu.memory_space<vmem>>, vector<16x256xf32>,
    return
  }
  func.func @transform_0(%arg0: i32) -> (i32, i32) {
    %c0_i32 = arith.constant 0 : i32
    %c0_i32_0 = arith.constant 0 : i32
    return %arg0, %c0_i32 : i32, i32
  }
  func.func @transform_1(%arg0: i32) -> (i32, i32) {
    %c0_i32 = arith.constant 0 : i32
    %c0_i32_0 = arith.constant 0 : i32
    %c0_i32_1 = arith.constant 0 : i32
    return %c0_i32, %c0_i32_0 : i32, i32
  }
  func.func @transform_2(%arg0: i32) -> (i32, i32) {
    %c0_i32 = arith.constant 0 : i32
    %c0_i32_0 = arith.constant 0 : i32
    %c0_i32_1 = arith.constant 0 : i32
    return %c0_i32, %c0_i32_0 : i32, i32
  }
  func.func @transform_3(%arg0: i32) -> (i32, i32) {
    %c0_i32 = arith.constant 0 : i32
    %c0_i32_0 = arith.constant 0 : i32
    return %arg0, %c0_i32 : i32, i32
  }
}

module attributes {stable_mosaic.version = 11 : i64} {
  func.func @_template_projection_kernel(%arg0: i32, %arg1: memref<16x128xf32, #tpu.memory_space<vmem>>, %arg2: memref<128x256xf32, #tpu.memory_space<vmem>>, %arg3: memref<1x256xf32, #tpu.memory_space<vmem>>, %arg4: memref<16x256xf32, #tpu.memory_space<vmem>>) attributes {dimension_semantics = [#tpu.dimension_semantics<parallel>], iteration_bounds = array<i64: 2>, scalar_prefetch = 0 : i64, scratch_operands = 0 : i64, tpu.core_type = #tpu.core_type<tc>, window_params = [{transform_indices = @transform_0, window_bounds = array<i64: 16, 128>}, {pipeline_mode = #tpu.pipeline_mode<synchronous>, transform_indices = @transform_1, window_bounds = array<i64: 128, 256>}, {pipeline_mode = #tpu.pipeline_mode<synchronous>, transform_indices = @transform_2, window_bounds = array<i64: 1, 256>}, {transform_indices = @transform_3, window_bounds = array<i64: 16, 256>}]} {
    %c0 = arith.constant 0 : index
    %c0_0 = arith.constant 0 : index
    %0 = vector.load %arg1[%c0, %c0_0] : memref<16x128xf32, #tpu.memory_space<vmem>>, vector<16x128xf32>
    %cst = arith.constant 0.000000e+00 : f32
    %1 = vector.broadcast %cst : f32 to vector<16x128xf32>
    %2 = arith.maximumf %0, %1 : vector<16x128xf32>
    %c0_1 = arith.constant 0 : index
    %c0_2 = arith.constant 0 : index
    %3 = vector.load %arg2[%c0_1, %c0_2] : memref<128x256xf32, #tpu.memory_space<vmem>>, vector<128x256xf32>
    %cst_3 = arith.constant dense<0.000000e+00> : vector<16x256xf32>
    %4 = tpu.matmul %2, %3, %cst_3 {dimension_numbers = #tpu.dot_dimension_numbers<[1], [0], [0], [1], [0, 0, 1, 1], [], []>} : vector<16x128xf32>, vector<128x256xf32>, vector<16x256xf32> -> vector<16x256xf32>
    %c0_4 = arith.constant 0 : index
    %c0_5 = arith.constant 0 : index
    %5 = vector.load %arg3[%c0_4, %c0_5] : memref<1x256xf32, #tpu.memory_space<vmem>>, vector<1x256xf32>
    %6 = vector.broadcast %5 : vector<1x256xf32> to vector<16x256xf32>
    %7 = arith.addf %4, %6 : vector<16x256xf32>
    %c0_6 = arith.constant 0 : index
    %c0_7 = arith.constant 0 : index
    %8 = vector.load %arg4[%c0_6, %c0_7] : memref<16x256xf32, #tpu.memory_space<vmem>>, vector<16x256xf32>
    tpu.vector_store %arg4[%c0_6, %c0_7], %7 {strides = array<i32>} : memref<16x256xf32, #tpu.memory_space<vmem>>, vector<16x256xf32>,
    return
  }
  func.func @transform_0(%arg0: i32) -> (i32, i32) {
    %c0_i32 = arith.constant 0 : i32
    %c0_i32_0 = arith.constant 0 : i32
    return %arg0, %c0_i32 : i32, i32
  }
  func.func @transform_1(%arg0: i32) -> (i32, i32) {
    %c0_i32 = arith.constant 0 : i32
    %c0_i32_0 = arith.constant 0 : i32
    %c0_i32_1 = arith.constant 0 : i32
    return %c0_i32, %c0_i32_0 : i32, i32
  }
  func.func @transform_2(%arg0: i32) -> (i32, i32) {
    %c0_i32 = arith.constant 0 : i32
    %c0_i32_0 = arith.constant 0 : i32
    %c0_i32_1 = arith.constant 0 : i32
    return %c0_i32, %c0_i32_0 : i32, i32
  }
  func.func @transform_3(%arg0: i32) -> (i32, i32) {
    %c0_i32 = arith.constant 0 : i32
    %c0_i32_0 = arith.constant 0 : i32
    return %arg0, %c0_i32 : i32, i32
  }
}

</mosaic_0001>

<llo_original>
// kernel: tpu_custom_call.1
$region0: #{tpu_custom_call.1}
  #allocation0 [shape = 'u32[]', space=smem, size = 0x4, offset = 0x4, fixed_abs, tag = 'smem constant byte address 0x4 - core index']
  #allocation1 [shape = 'u32[144,128]{1,0:T(1,128)}', space=vmem, size = 0x12000, scoped, tag = 'internal scratch']
  %s0 = inlined_call_operand.hbm [shape: f32[32,128], index: 0, kind: input, shape index: {}]
  %s1 = inlined_call_operand.hbm [shape: f32[128,256], index: 1, kind: input, shape index: {}]
  %s2 = inlined_call_operand.vmem [shape: f32[1,256], index: 2, kind: input, shape index: {}]
  %s3 = inlined_call_operand.hbm [shape: f32[32,256], index: 3, kind: output, shape index: {}]
  %s4 = sld [smem:[#allocation0]]
  $region53: #{tpu_custom_call.1} parent=0
    _
  %s6 = ssub.s32 1, %s4
  %s7 = scalar_select 0, %s6, %s4
  $region1: #{tpu_custom_call.1} parent=0
    #allocation2 [shape = 'u8[16384]{0}', space=vmem, size = 0x4000, scoped, tag = 'input window, operand 0']
    #allocation3 [shape = 's32[2]{0}', space=sflag, size = 0x8, scoped, tag = 'scoped memory for tpu_custom_call.1']
    #allocation4 [shape = 's32[2]{0}', space=sflag, size = 0x8, scoped, tag = 'scoped memory for tpu_custom_call.1']
    #allocation5 [shape = 'u8[131072]{0}', space=vmem, size = 0x20000, scoped, tag = 'input window, operand 1, single buffered']
    #allocation6 [shape = 's32[1]{0}', space=sflag, size = 0x4, scoped, tag = 'scoped memory for tpu_custom_call.1']
    #allocation7 [shape = 'u8[32768]{0}', space=vmem, size = 0x8000, scoped, tag = 'output window, operand 0']
    %8 = vsyncpa [#allocation3], 0
    %s9 = scalar_lea.sflag [#allocation3], 1
    %10 = vsyncpa %s9, 0
    %11 = vsyncpa [#allocation6], 0
    %12 = vsyncpa [#allocation4], 0
    %s13 = scalar_lea.sflag [#allocation4], 1
    %14 = vsyncpa %s13, 0
    loop: start=0, step=1, limit=4
    $region2: #{tpu_custom_call.1} parent=1 // loop_pre_header
      _
    $region3: #{tpu_custom_call.1} parent=1 // loop_header
      %s16 = sphi 0, %s20
      %p17 = scmp.ge.s32.totalorder %s16, 4
      %s26 = sphi 0, %s28
      %s29 = sphi 0, %s26
      %s30 = sphi 0, %s29
      %s46 = sphi 0, %s30
      %s50 = sphi 0, %s50
      %s52 = sphi 0, %s50
      %s53 = sphi 0, %s52
      %s67 = sphi 0, %s53
      %s71 = sphi 0, %s71
      %s73 = sphi 0, %s71
      %s74 = sphi 0, %s73
      %s88 = sphi 0, %s74
      %s94 = sphi 0, %s96
      %s97 = sphi 0, %s94
      %s98 = sphi 0, %s97
      %s114 = sphi 0, %s98
    $region4: #{tpu_custom_call.1} parent=1 // loop_header_branch
      %19 = sbr.rel (%p17) target = $region8
    $region5: #{tpu_custom_call.1} parent=1 // loop_body
      %s21 = ssub.s32 %s16, 1
      %s22 = ssub.s32 %s16, 2
      %s23 = sadd.s32 %s16, 1
      %s24 = ssub.s32 %s16, %s23
      %p25 = scmp.eq.s32.totalorder %s24, 0
      %s27 = sadd.s32 %s26, 1
      %s28 = scalar_select %p25, %s26, %s27
      %p31 = pneg %p25
      %p32 = scmp.eq.s32.totalorder %s16, 1
      %p33 = por %p31, %p32
      %p34 = scmp.ne.s32.totalorder %s26, %s29
      %p35 = scmp.eq.s32.totalorder %s16, 0
      %p36 = por %p34, %p35
      %p37 = scmp.ne.s32.totalorder %s26, %s29
      %p38 = scmp.eq.s32.totalorder %s21, 1
      %p39 = por %p37, %p38
      %p40 = scmp.ne.s32.totalorder %s29, %s30
      %p41 = scmp.eq.s32.totalorder %s21, 0
      %p42 = por %p40, %p41
      %p43 = scmp.ne.s32.totalorder %s29, %s30
      %p44 = scmp.eq.s32.totalorder %s22, 1
      %p45 = por %p43, %p44
      %p47 = scmp.ne.s32.totalorder %s30, %s46
      %p48 = scmp.eq.s32.totalorder %s22, 0
      %p49 = por %p47, %p48
      %s51 = sadd.s32 %s50, 1
      %p54 = scmp.eq.s32.totalorder %s16, 1
      %p55 = scmp.ne.s32.totalorder %s50, %s52
      %p56 = scmp.eq.s32.totalorder %s16, 0
      %p57 = por %p55, %p56
      %p58 = scmp.ne.s32.totalorder %s50, %s52
      %p59 = scmp.eq.s32.totalorder %s21, 1
      %p60 = por %p58, %p59
      %p61 = scmp.ne.s32.totalorder %s52, %s53
      %p62 = scmp.eq.s32.totalorder %s21, 0
      %p63 = por %p61, %p62
      %p64 = scmp.ne.s32.totalorder %s52, %s53
      %p65 = scmp.eq.s32.totalorder %s22, 1
      %p66 = por %p64, %p65
      %p68 = scmp.ne.s32.totalorder %s53, %s67
      %p69 = scmp.eq.s32.totalorder %s22, 0
      %p70 = por %p68, %p69
      %s72 = sadd.s32 %s71, 1
      %p75 = scmp.eq.s32.totalorder %s16, 1
      %p76 = scmp.ne.s32.totalorder %s71, %s73
      %p77 = scmp.eq.s32.totalorder %s16, 0
      %p78 = por %p76, %p77
      %p79 = scmp.ne.s32.totalorder %s71, %s73
      %p80 = scmp.eq.s32.totalorder %s21, 1
      %p81 = por %p79, %p80
      %p82 = scmp.ne.s32.totalorder %s73, %s74
      %p83 = scmp.eq.s32.totalorder %s21, 0
      %p84 = por %p82, %p83
      %p85 = scmp.ne.s32.totalorder %s73, %s74
      %p86 = scmp.eq.s32.totalorder %s22, 1
      %p87 = por %p85, %p86
      %p89 = scmp.ne.s32.totalorder %s74, %s88
      %p90 = scmp.eq.s32.totalorder %s22, 0
      %p91 = por %p89, %p90
      %s92 = ssub.s32 %s16, %s23
      %p93 = scmp.eq.s32.totalorder %s92, 0
      %s95 = sadd.s32 %s94, 1
      %s96 = scalar_select %p93, %s94, %s95
      %p99 = pneg %p93
      %p100 = scmp.eq.s32.totalorder %s16, 1
      %p101 = por %p99, %p100
      %p102 = scmp.ne.s32.totalorder %s94, %s97
      %p103 = scmp.eq.s32.totalorder %s16, 0
      %p104 = por %p102, %p103
      %p105 = scmp.ne.s32.totalorder %s94, %s97
      %p106 = scmp.eq.s32.totalorder %s21, 1
      %p107 = por %p105, %p106
      %p108 = scmp.ne.s32.totalorder %s97, %s98
      %p109 = scmp.eq.s32.totalorder %s21, 0
      %p110 = por %p108, %p109
      %p111 = scmp.ne.s32.totalorder %s97, %s98
      %p112 = scmp.eq.s32.totalorder %s22, 1
      %p113 = por %p111, %p112
      %p115 = scmp.ne.s32.totalorder %s98, %s114
      %p116 = scmp.eq.s32.totalorder %s22, 0
      %p117 = por %p115, %p116
      %p118 = scmp.le.s32.totalorder 1, %s16
      %p119 = scmp.lt.s32.totalorder %s16, 3
      %p120 = pnand %p118, %p119
      %p121 = pneg %p120
      // Predicated region
      $region9: #{tpu_custom_call.1} parent=5 // pred_check
        _
      $region10: #{tpu_custom_call.1} parent=5 // pred_check_branch
        %123 = sbr.rel (%p120) target = $region12
      $region11: #{tpu_custom_call.1} parent=5 // pred_region
        %s124 = ssub.s32 %s16, 1
        // Predicated region
        $region13: #{tpu_custom_call.1} parent=11 // pred_check
          %p125 = pneg %p63
        $region14: #{tpu_custom_call.1} parent=11 // pred_check_branch
          %127 = sbr.rel (%p125) target = $region16
        $region15: #{tpu_custom_call.1} parent=11 // pred_region
          %s129 = ssub.s32 4096, 4096
          %130 = vsyncadd [#allocation6], %s129
          %s131 = sshll.u32 [#allocation5], 4
          %s132 = int_to_ptr.vmem [resolvable:$true] %s131
          %137 = dma.hbm_to_vmem [thread:$0]  %s1, 4096, %s132, [#allocation6], 256, 256, 16
        $region16: #{tpu_custom_call.1} parent=11 // pred_fallthru
          _
        // Predicated region
        $region17: #{tpu_custom_call.1} parent=11 // pred_check
          %p138 = pneg %p84
        $region18: #{tpu_custom_call.1} parent=11 // pred_check_branch
          %140 = sbr.rel (%p138) target = $region20
        $region19: #{tpu_custom_call.1} parent=11 // pred_region
          _
        $region20: #{tpu_custom_call.1} parent=11 // pred_fallthru
          _
      $region12: #{tpu_custom_call.1} parent=5 // pred_fallthru
        _
      %p141 = scmp.lt.s32.totalorder %s16, 2
      // Predicated region
      $region21: #{tpu_custom_call.1} parent=5 // pred_check
        %p142 = pneg %p141
      $region22: #{tpu_custom_call.1} parent=5 // pred_check_branch
        %144 = sbr.rel (%p142) target = $region24
      $region23: #{tpu_custom_call.1} parent=5 // pred_region
        // Predicated region
        $region25: #{tpu_custom_call.1} parent=23 // pred_check
          %p145 = pneg %p36
        $region26: #{tpu_custom_call.1} parent=23 // pred_check_branch
          %147 = sbr.rel (%p145) target = $region28
        $region27: #{tpu_custom_call.1} parent=23 // pred_region
          %s148 = sand.u32 %s26, 1
          %s149 = scalar_lea.sflag [#allocation3], %s148
          %s150 = sand.u32 %s26, 1
          %s151 = smul.addr %s150, 16
          %s152 = scalar_lea.vmem [#allocation2], %s151
          %s153 = smul.u32 2, %s16
          %s155 = ssub.s32 256, 256
          %156 = vsyncadd %s149, %s155
          %s157 = smul.addr %s153, 128
          %s158 = scalar_lea.hbm %s0, %s157
          %s159 = sshll.u32 %s152, 4
          %s160 = int_to_ptr.vmem [resolvable:$true] %s159
          %165 = dma.hbm_to_vmem [thread:$0]  %s158, 256, %s160, %s149, 128, 128, 8
        $region28: #{tpu_custom_call.1} parent=23 // pred_fallthru
          _
      $region24: #{tpu_custom_call.1} parent=5 // pred_fallthru
        _
      %p166 = scmp.le.s32.totalorder 1, %s16
      %p167 = scmp.lt.s32.totalorder %s16, 3
      %p168 = pnand %p166, %p167
      %p169 = pneg %p168
      // Predicated region
      $region29: #{tpu_custom_call.1} parent=5 // pred_check
        _
      $region30: #{tpu_custom_call.1} parent=5 // pred_check_branch
        %171 = sbr.rel (%p168) target = $region32
      $region31: #{tpu_custom_call.1} parent=5 // pred_region
        %s172 = ssub.s32 %s16, 1
        %s173 = sand.u32 %s29, 1
        %s174 = scalar_lea.sflag [#allocation3], %s173
        %s175 = sand.u32 %s29, 1
        %s176 = smul.addr %s175, 16
        %s177 = scalar_lea.vmem [#allocation2], %s176
        // Predicated region
        $region33: #{tpu_custom_call.1} parent=31 // pred_check
          %p178 = pneg %p42
        $region34: #{tpu_custom_call.1} parent=31 // pred_check_branch
          %180 = sbr.rel (%p178) target = $region36
        $region35: #{tpu_custom_call.1} parent=31 // pred_region
          %181 = dma.done %s174, 256
        $region36: #{tpu_custom_call.1} parent=31 // pred_fallthru
          _
        // Predicated region
        $region37: #{tpu_custom_call.1} parent=31 // pred_check
          %p182 = pneg %p63
        $region38: #{tpu_custom_call.1} parent=31 // pred_check_branch
          %184 = sbr.rel (%p182) target = $region40
        $region39: #{tpu_custom_call.1} parent=31 // pred_region
          %185 = dma.done [#allocation6], 4096
        $region40: #{tpu_custom_call.1} parent=31 // pred_fallthru
          _
        %s186 = sand.u32 %s29, 1
        %s187 = scalar_lea.sflag [#allocation3], %s186
        %s188 = sand.u32 %s29, 1
        %s189 = smul.addr %s188, 16
        %s190 = scalar_lea.vmem [#allocation2], %s189
        %p191 = pneg %p42
        %p192 = pneg %p39
        %p193 = pneg %p63
        %p194 = pneg %p60
        %p195 = pneg %p84
        %p196 = pneg %p81
        %p197 = pneg %p110
        %p198 = pneg %p107
        %s199 = sand.u32 %s97, 1
        %s200 = scalar_lea.sflag [#allocation4], %s199
        %s201 = sand.u32 %s97, 1
        %s202 = smul.addr %s201, 32
        %s203 = scalar_lea.vmem [#allocation7], %s202
        %s204 = smul.u32 2, %s21
        %s205 = smul.u32 2, %s21
        %v206 = vld [vmem:[%s177] sm:$0xff]
        %v207 = vld [vmem:[%s177 + $0x8] sm:$0xff]
        %v208 = vmax.f32 %v206, 0.0
        %v209 = vmax.f32 %v207, 0.0
        %v210 = vld [vmem:[#allocation5] sm:$0xff]
        %v211 = vld [vmem:[#allocation5 + $0x8] sm:$0xff]
        %v212 = vld [vmem:[#allocation5 + $0x10] sm:$0xff]
        %v213 = vld [vmem:[#allocation5 + $0x18] sm:$0xff]
        %v214 = vld [vmem:[#allocation5 + $0x20] sm:$0xff]
        %v215 = vld [vmem:[#allocation5 + $0x28] sm:$0xff]
        %v216 = vld [vmem:[#allocation5 + $0x30] sm:$0xff]
        %v217 = vld [vmem:[#allocation5 + $0x38] sm:$0xff]
        %v218 = vld [vmem:[#allocation5 + $0x40] sm:$0xff]
        %v219 = vld [vmem:[#allocation5 + $0x48] sm:$0xff]
        %v220 = vld [vmem:[#allocation5 + $0x50] sm:$0xff]
        %v221 = vld [vmem:[#allocation5 + $0x58] sm:$0xff]
        %v222 = vld [vmem:[#allocation5 + $0x60] sm:$0xff]
        %v223 = vld [vmem:[#allocation5 + $0x68] sm:$0xff]
        %v224 = vld [vmem:[#allocation5 + $0x70] sm:$0xff]
        %v225 = vld [vmem:[#allocation5 + $0x78] sm:$0xff]
        %v226 = vld [vmem:[#allocation5 + $0x80] sm:$0xff]
        %v227 = vld [vmem:[#allocation5 + $0x88] sm:$0xff]
        %v228 = vld [vmem:[#allocation5 + $0x90] sm:$0xff]
        %v229 = vld [vmem:[#allocation5 + $0x98] sm:$0xff]
        %v230 = vld [vmem:[#allocation5 + $0xa0] sm:$0xff]
        %v231 = vld [vmem:[#allocation5 + $0xa8] sm:$0xff]
        %v232 = vld [vmem:[#allocation5 + $0xb0] sm:$0xff]
        %v233 = vld [vmem:[#allocation5 + $0xb8] sm:$0xff]
        %v234 = vld [vmem:[#allocation5 + $0xc0] sm:$0xff]
        %v235 = vld [vmem:[#allocation5 + $0xc8] sm:$0xff]
        %v236 = vld [vmem:[#allocation5 + $0xd0] sm:$0xff]
        %v237 = vld [vmem:[#allocation5 + $0xd8] sm:$0xff]
        %v238 = vld [vmem:[#allocation5 + $0xe0] sm:$0xff]
        %v239 = vld [vmem:[#allocation5 + $0xe8] sm:$0xff]
        %v240 = vld [vmem:[#allocation5 + $0xf0] sm:$0xff]
        %v241 = vld [vmem:[#allocation5 + $0xf8] sm:$0xff]
        %v242 = vld [vmem:[%s2] sm:$0x3]
        %v244 = vlaneseq
        %v245 = vshrl.u32 %v244, 7
        %v246 = vsub.s32 0, %v245
        %v247 = vrot.slane %v242, %v246
        %v248 = vlaneseq
        %v249 = vshrl.u32 %v248, 7
        %v250 = vsub.s32 1, %v249
        %v251 = vrot.slane %v242, %v250
        %v254 = vand.u32 %v241, 4294901760
        %255 = vmatprep.subr.mxu0 %v254
        %v256 = vand.u32 %v240, 4294901760
        %257 = vmatpush1.msra.mxu0 %v256
        %v258 = vand.u32 %v239, 4294901760
        %259 = vmatprep.subr.mxu0 %v258
        %v260 = vand.u32 %v238, 4294901760
        %261 = vmatpush1.msra.mxu0 %v260
        %v262 = vand.u32 %v237, 4294901760
        %263 = vmatprep.subr.mxu0 %v262
        %v264 = vand.u32 %v236, 4294901760
        %265 = vmatpush1.msra.mxu0 %v264
        %v266 = vand.u32 %v235, 4294901760
        %267 = vmatprep.subr.mxu0 %v266
        %v268 = vand.u32 %v234, 4294901760
        %269 = vmatpush1.msra.mxu0 %v268
        %v270 = vand.u32 %v233, 4294901760
        %271 = vmatprep.subr.mxu0 %v270
        %v272 = vand.u32 %v232, 4294901760
        %273 = vmatpush1.msra.mxu0 %v272
        %v274 = vand.u32 %v231, 4294901760
        %275 = vmatprep.subr.mxu0 %v274
        %v276 = vand.u32 %v230, 4294901760
        %277 = vmatpush1.msra.mxu0 %v276
        %v278 = vand.u32 %v229, 4294901760
        %279 = vmatprep.subr.mxu0 %v278
        %v280 = vand.u32 %v228, 4294901760
        %281 = vmatpush1.msra.mxu0 %v280
        %v282 = vand.u32 %v227, 4294901760
        %283 = vmatprep.subr.mxu0 %v282
        %v284 = vand.u32 %v226, 4294901760
        %285 = vmatpush1.msra.mxu0 %v284
        %v286 = vand.u32 %v225, 4294901760
        %287 = vmatprep.subr.mxu0 %v286
        %v288 = vand.u32 %v224, 4294901760
        %289 = vmatpush1.msra.mxu0 %v288
        %v290 = vand.u32 %v223, 4294901760
        %291 = vmatprep.subr.mxu0 %v290
        %v292 = vand.u32 %v222, 4294901760
        %293 = vmatpush1.msra.mxu0 %v292
        %v294 = vand.u32 %v221, 4294901760
        %295 = vmatprep.subr.mxu0 %v294
        %v296 = vand.u32 %v220, 4294901760
        %297 = vmatpush1.msra.mxu0 %v296
        %v298 = vand.u32 %v219, 4294901760
        %299 = vmatprep.subr.mxu0 %v298
        %v300 = vand.u32 %v218, 4294901760
        %301 = vmatpush1.msra.mxu0 %v300
        %v302 = vand.u32 %v217, 4294901760
        %303 = vmatprep.subr.mxu0 %v302
        %v304 = vand.u32 %v216, 4294901760
        %305 = vmatpush1.msra.mxu0 %v304
        %v306 = vand.u32 %v215, 4294901760
        %307 = vmatprep.subr.mxu0 %v306
        %v308 = vand.u32 %v214, 4294901760
        %309 = vmatpush1.msra.mxu0 %v308
        %v310 = vand.u32 %v213, 4294901760
        %311 = vmatprep.subr.mxu0 %v310
        %v312 = vand.u32 %v212, 4294901760
        %313 = vmatpush1.msra.mxu0 %v312
        %v314 = vand.u32 %v211, 4294901760
        %315 = vmatprep.subr.mxu0 %v314
        %v316 = vand.u32 %v210, 4294901760
        %317 = vmatpush1.msra.mxu0 %v316
        %318 = vmatprep.subr.mxu0 0.0
        %319 = vmatpush2.msra.mxu0 0.0
        %320 = vmatprep.subr.mxu0 0.0
        %321 = vmatpush2.msra.mxu0 0.0
        %322 = vmatprep.subr.mxu0 0.0
        %323 = vmatpush2.msra.mxu0 0.0
        %324 = vmatprep.subr.mxu0 0.0
        %325 = vmatpush2.msra.mxu0 0.0
        %326 = vmatprep.subr.mxu0 0.0
        %327 = vmatpush2.msra.mxu0 0.0
        %328 = vmatprep.subr.mxu0 0.0
        %329 = vmatpush2.msra.mxu0 0.0
        %330 = vmatprep.subr.mxu0 0.0
        %331 = vmatpush2.msra.mxu0 0.0
        %332 = vmatprep.subr.mxu0 0.0
        %333 = vmatpush2.msra.mxu0 0.0
        %334 = vmatprep.subr.mxu0 0.0
        %335 = vmatpush2.msra.mxu0 0.0
        %336 = vmatprep.subr.mxu0 0.0
        %337 = vmatpush2.msra.mxu0 0.0
        %338 = vmatprep.subr.mxu0 0.0
        %339 = vmatpush2.msra.mxu0 0.0
        %340 = vmatprep.subr.mxu0 0.0
        %341 = vmatpush2.msra.mxu0 0.0
        %342 = vmatprep.subr.mxu0 0.0
        %343 = vmatpush2.msra.mxu0 0.0
        %344 = vmatprep.subr.mxu0 0.0
        %345 = vmatpush2.msra.mxu0 0.0
        %346 = vmatprep.subr.mxu0 0.0
        %347 = vmatpush2.msra.mxu0 0.0
        %348 = vmatprep.subr.mxu0 0.0
        %349 = vmatpush2.msra.mxu0 0.0
        %350 = vmatprep.mubr.f32.mxu0 0.0
        %v351 = vand.u32 %v208, 4294901760
        %v352 = vsub.f32 %v208, %v351
        %v353 = vand.u32 %v352, 4294901760
        %v354 = vsub.f32 %v352, %v353
        %v355 = vand.u32 %v354, 4294901760
        %356 = vmatmul.mubr.f32.gmra.mxu0 %v355
        %v357 = vpop.f32.mrf.mxu0
        %v358 = vadd.f32 %v247, %v357
        %v359 = vpop.f32.mrf.mxu0
        %v360 = vadd.f32 %v251, %v359
        %361 = vmatprep.mubr.f32.mxu0 0.0
        %v362 = vand.u32 %v209, 4294901760
        %v363 = vsub.f32 %v209, %v362
        %v364 = vand.u32 %v363, 4294901760
        %v365 = vsub.f32 %v363, %v364
        %v366 = vand.u32 %v365, 4294901760
        %367 = vmatmul.mubr.f32.gmra.mxu0 %v366
        %v368 = vpop.f32.mrf.mxu0
        %v369 = vadd.f32 %v247, %v368
        %v370 = vpop.f32.mrf.mxu0
        %v371 = vadd.f32 %v251, %v370
        %372 = vdwg.mxu0
        %v373 = vand.u32 %v241, 4294901760
        %v374 = vsub.f32 %v241, %v373
        %v375 = vand.u32 %v374, 4294901760
        %v376 = vsub.f32 %v374, %v375
        %v377 = vand.u32 %v376, 4294901760
        %378 = vmatprep.subr.mxu0 %v377
        %v379 = vand.u32 %v240, 4294901760
        %v380 = vsub.f32 %v240, %v379
        %v381 = vand.u32 %v380, 4294901760
        %v382 = vsub.f32 %v380, %v381
        %v383 = vand.u32 %v382, 4294901760
        %384 = vmatpush1.msra.mxu0 %v383
        %v385 = vand.u32 %v239, 4294901760
        %v386 = vsub.f32 %v239, %v385
        %v387 = vand.u32 %v386, 4294901760
        %v388 = vsub.f32 %v386, %v387
        %v389 = vand.u32 %v388, 4294901760
        %390 = vmatprep.subr.mxu0 %v389
        %v391 = vand.u32 %v238, 4294901760
        %v392 = vsub.f32 %v238, %v391
        %v393 = vand.u32 %v392, 4294901760
        %v394 = vsub.f32 %v392, %v393
        %v395 = vand.u32 %v394, 4294901760
        %396 = vmatpush1.msra.mxu0 %v395
        %v397 = vand.u32 %v237, 4294901760
        %v398 = vsub.f32 %v237, %v397
        %v399 = vand.u32 %v398, 4294901760
        %v400 = vsub.f32 %v398, %v399
        %v401 = vand.u32 %v400, 4294901760
        %402 = vmatprep.subr.mxu0 %v401
        %v403 = vand.u32 %v236, 4294901760
        %v404 = vsub.f32 %v236, %v403
        %v405 = vand.u32 %v404, 4294901760
        %v406 = vsub.f32 %v404, %v405
        %v407 = vand.u32 %v406, 4294901760
        %408 = vmatpush1.msra.mxu0 %v407
        %v409 = vand.u32 %v235, 4294901760
        %v410 = vsub.f32 %v235, %v409
        %v411 = vand.u32 %v410, 4294901760
        %v412 = vsub.f32 %v410, %v411
        %v413 = vand.u32 %v412, 4294901760
        %414 = vmatprep.subr.mxu0 %v413
        %v415 = vand.u32 %v234, 4294901760
        %v416 = vsub.f32 %v234, %v415
        %v417 = vand.u32 %v416, 4294901760
        %v418 = vsub.f32 %v416, %v417
        %v419 = vand.u32 %v418, 4294901760
        %420 = vmatpush1.msra.mxu0 %v419
        %v421 = vand.u32 %v233, 4294901760
        %v422 = vsub.f32 %v233, %v421
        %v423 = vand.u32 %v422, 4294901760
        %v424 = vsub.f32 %v422, %v423
        %v425 = vand.u32 %v424, 4294901760
        %426 = vmatprep.subr.mxu0 %v425
        %v427 = vand.u32 %v232, 4294901760
        %v428 = vsub.f32 %v232, %v427
        %v429 = vand.u32 %v428, 4294901760
        %v430 = vsub.f32 %v428, %v429
        %v431 = vand.u32 %v430, 4294901760
        %432 = vmatpush1.msra.mxu0 %v431
        %v433 = vand.u32 %v231, 4294901760
        %v434 = vsub.f32 %v231, %v433
        %v435 = vand.u32 %v434, 4294901760
        %v436 = vsub.f32 %v434, %v435
        %v437 = vand.u32 %v436, 4294901760
        %438 = vmatprep.subr.mxu0 %v437
        %v439 = vand.u32 %v230, 4294901760
        %v440 = vsub.f32 %v230, %v439
        %v441 = vand.u32 %v440, 4294901760
        %v442 = vsub.f32 %v440, %v441
        %v443 = vand.u32 %v442, 4294901760
        %444 = vmatpush1.msra.mxu0 %v443
        %v445 = vand.u32 %v229, 4294901760
        %v446 = vsub.f32 %v229, %v445
        %v447 = vand.u32 %v446, 4294901760
        %v448 = vsub.f32 %v446, %v447
        %v449 = vand.u32 %v448, 4294901760
        %450 = vmatprep.subr.mxu0 %v449
        %v451 = vand.u32 %v228, 4294901760
        %v452 = vsub.f32 %v228, %v451
        %v453 = vand.u32 %v452, 4294901760
        %v454 = vsub.f32 %v452, %v453
        %v455 = vand.u32 %v454, 4294901760
        %456 = vmatpush1.msra.mxu0 %v455
        %v457 = vand.u32 %v227, 4294901760
        %v458 = vsub.f32 %v227, %v457
        %v459 = vand.u32 %v458, 4294901760
        %v460 = vsub.f32 %v458, %v459
        %v461 = vand.u32 %v460, 4294901760
        %462 = vmatprep.subr.mxu0 %v461
        %v463 = vand.u32 %v226, 4294901760
        %v464 = vsub.f32 %v226, %v463
        %v465 = vand.u32 %v464, 4294901760
        %v466 = vsub.f32 %v464, %v465
        %v467 = vand.u32 %v466, 4294901760
        %468 = vmatpush1.msra.mxu0 %v467
        %v469 = vand.u32 %v225, 4294901760
        %v470 = vsub.f32 %v225, %v469
        %v471 = vand.u32 %v470, 4294901760
        %v472 = vsub.f32 %v470, %v471
        %v473 = vand.u32 %v472, 4294901760
        %474 = vmatprep.subr.mxu0 %v473
        %v475 = vand.u32 %v224, 4294901760
        %v476 = vsub.f32 %v224, %v475
        %v477 = vand.u32 %v476, 4294901760
        %v478 = vsub.f32 %v476, %v477
        %v479 = vand.u32 %v478, 4294901760
        %480 = vmatpush1.msra.mxu0 %v479
        %v481 = vand.u32 %v223, 4294901760
        %v482 = vsub.f32 %v223, %v481
        %v483 = vand.u32 %v482, 4294901760
        %v484 = vsub.f32 %v482, %v483
        %v485 = vand.u32 %v484, 4294901760
        %486 = vmatprep.subr.mxu0 %v485
        %v487 = vand.u32 %v222, 4294901760
        %v488 = vsub.f32 %v222, %v487
        %v489 = vand.u32 %v488, 4294901760
        %v490 = vsub.f32 %v488, %v489
        %v491 = vand.u32 %v490, 4294901760
        %492 = vmatpush1.msra.mxu0 %v491
        %v493 = vand.u32 %v221, 4294901760
        %v494 = vsub.f32 %v221, %v493
        %v495 = vand.u32 %v494, 4294901760
        %v496 = vsub.f32 %v494, %v495
        %v497 = vand.u32 %v496, 4294901760
        %498 = vmatprep.subr.mxu0 %v497
        %v499 = vand.u32 %v220, 4294901760
        %v500 = vsub.f32 %v220, %v499
        %v501 = vand.u32 %v500, 4294901760
        %v502 = vsub.f32 %v500, %v501
        %v503 = vand.u32 %v502, 4294901760
        %504 = vmatpush1.msra.mxu0 %v503
        %v505 = vand.u32 %v219, 4294901760
        %v506 = vsub.f32 %v219, %v505
        %v507 = vand.u32 %v506, 4294901760
        %v508 = vsub.f32 %v506, %v507
        %v509 = vand.u32 %v508, 4294901760
        %510 = vmatprep.subr.mxu0 %v509
        %v511 = vand.u32 %v218, 4294901760
        %v512 = vsub.f32 %v218, %v511
        %v513 = vand.u32 %v512, 4294901760
        %v514 = vsub.f32 %v512, %v513
        %v515 = vand.u32 %v514, 4294901760
        %516 = vmatpush1.msra.mxu0 %v515
        %v517 = vand.u32 %v217, 4294901760
        %v518 = vsub.f32 %v217, %v517
        %v519 = vand.u32 %v518, 4294901760
        %v520 = vsub.f32 %v518, %v519
        %v521 = vand.u32 %v520, 4294901760
        %522 = vmatprep.subr.mxu0 %v521
        %v523 = vand.u32 %v216, 4294901760
        %v524 = vsub.f32 %v216, %v523
        %v525 = vand.u32 %v524, 4294901760
        %v526 = vsub.f32 %v524, %v525
        %v527 = vand.u32 %v526, 4294901760
        %528 = vmatpush1.msra.mxu0 %v527
        %v529 = vand.u32 %v215, 4294901760
        %v530 = vsub.f32 %v215, %v529
        %v531 = vand.u32 %v530, 4294901760
        %v532 = vsub.f32 %v530, %v531
        %v533 = vand.u32 %v532, 4294901760
        %534 = vmatprep.subr.mxu0 %v533
        %v535 = vand.u32 %v214, 4294901760
        %v536 = vsub.f32 %v214, %v535
        %v537 = vand.u32 %v536, 4294901760
        %v538 = vsub.f32 %v536, %v537
        %v539 = vand.u32 %v538, 4294901760
        %540 = vmatpush1.msra.mxu0 %v539
        %v541 = vand.u32 %v213, 4294901760
        %v542 = vsub.f32 %v213, %v541
        %v543 = vand.u32 %v542, 4294901760
        %v544 = vsub.f32 %v542, %v543
        %v545 = vand.u32 %v544, 4294901760
        %546 = vmatprep.subr.mxu0 %v545
        %v547 = vand.u32 %v212, 4294901760
        %v548 = vsub.f32 %v212, %v547
        %v549 = vand.u32 %v548, 4294901760
        %v550 = vsub.f32 %v548, %v549
        %v551 = vand.u32 %v550, 4294901760
        %552 = vmatpush1.msra.mxu0 %v551
        %v553 = vand.u32 %v211, 4294901760
        %v554 = vsub.f32 %v211, %v553
        %v555 = vand.u32 %v554, 4294901760
        %v556 = vsub.f32 %v554, %v555
        %v557 = vand.u32 %v556, 4294901760
        %558 = vmatprep.subr.mxu0 %v557
        %v559 = vand.u32 %v210, 4294901760
        %v560 = vsub.f32 %v210, %v559
        %v561 = vand.u32 %v560, 4294901760
        %v562 = vsub.f32 %v560, %v561
        %v563 = vand.u32 %v562, 4294901760
        %564 = vmatpush1.msra.mxu0 %v563
        %565 = vmatprep.subr.mxu0 0.0
        %566 = vmatpush2.msra.mxu0 0.0
        %567 = vmatprep.subr.mxu0 0.0
        %568 = vmatpush2.msra.mxu0 0.0
        %569 = vmatprep.subr.mxu0 0.0
        %570 = vmatpush2.msra.mxu0 0.0
        %571 = vmatprep.subr.mxu0 0.0
        %572 = vmatpush2.msra.mxu0 0.0
        %573 = vmatprep.subr.mxu0 0.0
        %574 = vmatpush2.msra.mxu0 0.0
        %575 = vmatprep.subr.mxu0 0.0
        %576 = vmatpush2.msra.mxu0 0.0
        %577 = vmatprep.subr.mxu0 0.0
        %578 = vmatpush2.msra.mxu0 0.0
        %579 = vmatprep.subr.mxu0 0.0
        %580 = vmatpush2.msra.mxu0 0.0
        %581 = vmatprep.subr.mxu0 0.0
        %582 = vmatpush2.msra.mxu0 0.0
        %583 = vmatprep.subr.mxu0 0.0
        %584 = vmatpush2.msra.mxu0 0.0
        %585 = vmatprep.subr.mxu0 0.0
        %586 = vmatpush2.msra.mxu0 0.0
        %587 = vmatprep.subr.mxu0 0.0
        %588 = vmatpush2.msra.mxu0 0.0
        %589 = vmatprep.subr.mxu0 0.0
        %590 = vmatpush2.msra.mxu0 0.0
        %591 = vmatprep.subr.mxu0 0.0
        %592 = vmatpush2.msra.mxu0 0.0
        %593 = vmatprep.subr.mxu0 0.0
        %594 = vmatpush2.msra.mxu0 0.0
        %595 = vmatprep.subr.mxu0 0.0
        %596 = vmatpush2.msra.mxu0 0.0
        %597 = vmatprep.mubr.f32.mxu0 0.0
        %v598 = vand.u32 %v208, 4294901760
        %599 = vmatmul.mubr.f32.gmra.mxu0 %v598
        %v600 = vpop.f32.mrf.mxu0
        %v601 = vadd.f32 %v358, %v600
        %v602 = vpop.f32.mrf.mxu0
        %v603 = vadd.f32 %v360, %v602
        %604 = vmatprep.mubr.f32.mxu0 0.0
        %v605 = vand.u32 %v209, 4294901760
        %606 = vmatmul.mubr.f32.gmra.mxu0 %v605
        %v607 = vpop.f32.mrf.mxu0
        %v608 = vadd.f32 %v369, %v607
        %v609 = vpop.f32.mrf.mxu0
        %v610 = vadd.f32 %v371, %v609
        %611 = vdwg.mxu0
        %v612 = vand.u32 %v241, 4294901760
        %v613 = vsub.f32 %v241, %v612
        %614 = vmatprep.subr.mxu0 %v613
        %v615 = vand.u32 %v240, 4294901760
        %v616 = vsub.f32 %v240, %v615
        %617 = vmatpush1.msra.mxu0 %v616
        %v618 = vand.u32 %v239, 4294901760
        %v619 = vsub.f32 %v239, %v618
        %620 = vmatprep.subr.mxu0 %v619
        %v621 = vand.u32 %v238, 4294901760
        %v622 = vsub.f32 %v238, %v621
        %623 = vmatpush1.msra.mxu0 %v622
        %v624 = vand.u32 %v237, 4294901760
        %v625 = vsub.f32 %v237, %v624
        %626 = vmatprep.subr.mxu0 %v625
        %v627 = vand.u32 %v236, 4294901760
        %v628 = vsub.f32 %v236, %v627
        %629 = vmatpush1.msra.mxu0 %v628
        %v630 = vand.u32 %v235, 4294901760
        %v631 = vsub.f32 %v235, %v630
        %632 = vmatprep.subr.mxu0 %v631
        %v633 = vand.u32 %v234, 4294901760
        %v634 = vsub.f32 %v234, %v633
        %635 = vmatpush1.msra.mxu0 %v634
        %v636 = vand.u32 %v233, 4294901760
        %v637 = vsub.f32 %v233, %v636
        %638 = vmatprep.subr.mxu0 %v637
        %v639 = vand.u32 %v232, 4294901760
        %v640 = vsub.f32 %v232, %v639
        %641 = vmatpush1.msra.mxu0 %v640
        %v642 = vand.u32 %v231, 4294901760
        %v643 = vsub.f32 %v231, %v642
        %644 = vmatprep.subr.mxu0 %v643
        %v645 = vand.u32 %v230, 4294901760
        %v646 = vsub.f32 %v230, %v645
        %647 = vmatpush1.msra.mxu0 %v646
        %v648 = vand.u32 %v229, 4294901760
        %v649 = vsub.f32 %v229, %v648
        %650 = vmatprep.subr.mxu0 %v649
        %v651 = vand.u32 %v228, 4294901760
        %v652 = vsub.f32 %v228, %v651
        %653 = vmatpush1.msra.mxu0 %v652
        %v654 = vand.u32 %v227, 4294901760
        %v655 = vsub.f32 %v227, %v654
        %656 = vmatprep.subr.mxu0 %v655
        %v657 = vand.u32 %v226, 4294901760
        %v658 = vsub.f32 %v226, %v657
        %659 = vmatpush1.msra.mxu0 %v658
        %v660 = vand.u32 %v225, 4294901760
        %v661 = vsub.f32 %v225, %v660
        %662 = vmatprep.subr.mxu0 %v661
        %v663 = vand.u32 %v224, 4294901760
        %v664 = vsub.f32 %v224, %v663
        %665 = vmatpush1.msra.mxu0 %v664
        %v666 = vand.u32 %v223, 4294901760
        %v667 = vsub.f32 %v223, %v666
        %668 = vmatprep.subr.mxu0 %v667
        %v669 = vand.u32 %v222, 4294901760
        %v670 = vsub.f32 %v222, %v669
        %671 = vmatpush1.msra.mxu0 %v670
        %v672 = vand.u32 %v221, 4294901760
        %v673 = vsub.f32 %v221, %v672
        %674 = vmatprep.subr.mxu0 %v673
        %v675 = vand.u32 %v220, 4294901760
        %v676 = vsub.f32 %v220, %v675
        %677 = vmatpush1.msra.mxu0 %v676
        %v678 = vand.u32 %v219, 4294901760
        %v679 = vsub.f32 %v219, %v678
        %680 = vmatprep.subr.mxu0 %v679
        %v681 = vand.u32 %v218, 4294901760
        %v682 = vsub.f32 %v218, %v681
        %683 = vmatpush1.msra.mxu0 %v682
        %v684 = vand.u32 %v217, 4294901760
        %v685 = vsub.f32 %v217, %v684
        %686 = vmatprep.subr.mxu0 %v685
        %v687 = vand.u32 %v216, 4294901760
        %v688 = vsub.f32 %v216, %v687
        %689 = vmatpush1.msra.mxu0 %v688
        %v690 = vand.u32 %v215, 4294901760
        %v691 = vsub.f32 %v215, %v690
        %692 = vmatprep.subr.mxu0 %v691
        %v693 = vand.u32 %v214, 4294901760
        %v694 = vsub.f32 %v214, %v693
        %695 = vmatpush1.msra.mxu0 %v694
        %v696 = vand.u32 %v213, 4294901760
        %v697 = vsub.f32 %v213, %v696
        %698 = vmatprep.subr.mxu0 %v697
        %v699 = vand.u32 %v212, 4294901760
        %v700 = vsub.f32 %v212, %v699
        %701 = vmatpush1.msra.mxu0 %v700
        %v702 = vand.u32 %v211, 4294901760
        %v703 = vsub.f32 %v211, %v702
        %704 = vmatprep.subr.mxu0 %v703
        %v705 = vand.u32 %v210, 4294901760
        %v706 = vsub.f32 %v210, %v705
        %707 = vmatpush1.msra.mxu0 %v706
        %708 = vmatprep.subr.mxu0 0.0
        %709 = vmatpush2.msra.mxu0 0.0
        %710 = vmatprep.subr.mxu0 0.0
        %711 = vmatpush2.msra.mxu0 0.0
        %712 = vmatprep.subr.mxu0 0.0
        %713 = vmatpush2.msra.mxu0 0.0
        %714 = vmatprep.subr.mxu0 0.0
        %715 = vmatpush2.msra.mxu0 0.0
        %716 = vmatprep.subr.mxu0 0.0
        %717 = vmatpush2.msra.mxu0 0.0
        %718 = vmatprep.subr.mxu0 0.0
        %719 = vmatpush2.msra.mxu0 0.0
        %720 = vmatprep.subr.mxu0 0.0
        %721 = vmatpush2.msra.mxu0 0.0
        %722 = vmatprep.subr.mxu0 0.0
        %723 = vmatpush2.msra.mxu0 0.0
        %724 = vmatprep.subr.mxu0 0.0
        %725 = vmatpush2.msra.mxu0 0.0
        %726 = vmatprep.subr.mxu0 0.0
        %727 = vmatpush2.msra.mxu0 0.0
        %728 = vmatprep.subr.mxu0 0.0
        %729 = vmatpush2.msra.mxu0 0.0
        %730 = vmatprep.subr.mxu0 0.0
        %731 = vmatpush2.msra.mxu0 0.0
        %732 = vmatprep.subr.mxu0 0.0
        %733 = vmatpush2.msra.mxu0 0.0
        %734 = vmatprep.subr.mxu0 0.0
        %735 = vmatpush2.msra.mxu0 0.0
        %736 = vmatprep.subr.mxu0 0.0
        %737 = vmatpush2.msra.mxu0 0.0
        %738 = vmatprep.subr.mxu0 0.0
        %739 = vmatpush2.msra.mxu0 0.0
        %740 = vmatprep.mubr.f32.mxu0 0.0
        %v741 = vand.u32 %v208, 4294901760
        %v742 = vsub.f32 %v208, %v741
        %743 = vmatmul.mubr.f32.gmra.mxu0 %v742
        %v744 = vpop.f32.mrf.mxu0
        %v745 = vadd.f32 %v601, %v744
        %v746 = vpop.f32.mrf.mxu0
        %v747 = vadd.f32 %v603, %v746
        %748 = vmatprep.mubr.f32.mxu0 0.0
        %v749 = vand.u32 %v209, 4294901760
        %v750 = vsub.f32 %v209, %v749
        %751 = vmatmul.mubr.f32.gmra.mxu0 %v750
        %v752 = vpop.f32.mrf.mxu0
        %v753 = vadd.f32 %v608, %v752
        %v754 = vpop.f32.mrf.mxu0
        %v755 = vadd.f32 %v610, %v754
        %756 = vdwg.mxu0
        %v757 = vand.u32 %v241, 4294901760
        %758 = vmatprep.subr.mxu0 %v757
        %v759 = vand.u32 %v240, 4294901760
        %760 = vmatpush1.msra.mxu0 %v759
        %v761 = vand.u32 %v239, 4294901760
        %762 = vmatprep.subr.mxu0 %v761
        %v763 = vand.u32 %v238, 4294901760
        %764 = vmatpush1.msra.mxu0 %v763
        %v765 = vand.u32 %v237, 4294901760
        %766 = vmatprep.subr.mxu0 %v765
        %v767 = vand.u32 %v236, 4294901760
        %768 = vmatpush1.msra.mxu0 %v767
        %v769 = vand.u32 %v235, 4294901760
        %770 = vmatprep.subr.mxu0 %v769
        %v771 = vand.u32 %v234, 4294901760
        %772 = vmatpush1.msra.mxu0 %v771
        %v773 = vand.u32 %v233, 4294901760
        %774 = vmatprep.subr.mxu0 %v773
        %v775 = vand.u32 %v232, 4294901760
        %776 = vmatpush1.msra.mxu0 %v775
        %v777 = vand.u32 %v231, 4294901760
        %778 = vmatprep.subr.mxu0 %v777
        %v779 = vand.u32 %v230, 4294901760
        %780 = vmatpush1.msra.mxu0 %v779
        %v781 = vand.u32 %v229, 4294901760
        %782 = vmatprep.subr.mxu0 %v781
        %v783 = vand.u32 %v228, 4294901760
        %784 = vmatpush1.msra.mxu0 %v783
        %v785 = vand.u32 %v227, 4294901760
        %786 = vmatprep.subr.mxu0 %v785
        %v787 = vand.u32 %v226, 4294901760
        %788 = vmatpush1.msra.mxu0 %v787
        %v789 = vand.u32 %v225, 4294901760
        %790 = vmatprep.subr.mxu0 %v789
        %v791 = vand.u32 %v224, 4294901760
        %792 = vmatpush1.msra.mxu0 %v791
        %v793 = vand.u32 %v223, 4294901760
        %794 = vmatprep.subr.mxu0 %v793
        %v795 = vand.u32 %v222, 4294901760
        %796 = vmatpush1.msra.mxu0 %v795
        %v797 = vand.u32 %v221, 4294901760
        %798 = vmatprep.subr.mxu0 %v797
        %v799 = vand.u32 %v220, 4294901760
        %800 = vmatpush1.msra.mxu0 %v799
        %v801 = vand.u32 %v219, 4294901760
        %802 = vmatprep.subr.mxu0 %v801
        %v803 = vand.u32 %v218, 4294901760
        %804 = vmatpush1.msra.mxu0 %v803
        %v805 = vand.u32 %v217, 4294901760
        %806 = vmatprep.subr.mxu0 %v805
        %v807 = vand.u32 %v216, 4294901760
        %808 = vmatpush1.msra.mxu0 %v807
        %v809 = vand.u32 %v215, 4294901760
        %810 = vmatprep.subr.mxu0 %v809
        %v811 = vand.u32 %v214, 4294901760
        %812 = vmatpush1.msra.mxu0 %v811
        %v813 = vand.u32 %v213, 4294901760
        %814 = vmatprep.subr.mxu0 %v813
        %v815 = vand.u32 %v212, 4294901760
        %816 = vmatpush1.msra.mxu0 %v815
        %v817 = vand.u32 %v211, 4294901760
        %818 = vmatprep.subr.mxu0 %v817
        %v819 = vand.u32 %v210, 4294901760
        %820 = vmatpush1.msra.mxu0 %v819
        %821 = vmatprep.subr.mxu0 0.0
        %822 = vmatpush2.msra.mxu0 0.0
        %823 = vmatprep.subr.mxu0 0.0
        %824 = vmatpush2.msra.mxu0 0.0
        %825 = vmatprep.subr.mxu0 0.0
        %826 = vmatpush2.msra.mxu0 0.0
        %827 = vmatprep.subr.mxu0 0.0
        %828 = vmatpush2.msra.mxu0 0.0
        %829 = vmatprep.subr.mxu0 0.0
        %830 = vmatpush2.msra.mxu0 0.0
        %831 = vmatprep.subr.mxu0 0.0
        %832 = vmatpush2.msra.mxu0 0.0
        %833 = vmatprep.subr.mxu0 0.0
        %834 = vmatpush2.msra.mxu0 0.0
        %835 = vmatprep.subr.mxu0 0.0
        %836 = vmatpush2.msra.mxu0 0.0
        %837 = vmatprep.subr.mxu0 0.0
        %838 = vmatpush2.msra.mxu0 0.0
        %839 = vmatprep.subr.mxu0 0.0
        %840 = vmatpush2.msra.mxu0 0.0
        %841 = vmatprep.subr.mxu0 0.0
        %842 = vmatpush2.msra.mxu0 0.0
        %843 = vmatprep.subr.mxu0 0.0
        %844 = vmatpush2.msra.mxu0 0.0
        %845 = vmatprep.subr.mxu0 0.0
        %846 = vmatpush2.msra.mxu0 0.0
        %847 = vmatprep.subr.mxu0 0.0
        %848 = vmatpush2.msra.mxu0 0.0
        %849 = vmatprep.subr.mxu0 0.0
        %850 = vmatpush2.msra.mxu0 0.0
        %851 = vmatprep.subr.mxu0 0.0
        %852 = vmatpush2.msra.mxu0 0.0
        %853 = vmatprep.mubr.f32.mxu0 0.0
        %v854 = vand.u32 %v208, 4294901760
        %v855 = vsub.f32 %v208, %v854
        %v856 = vand.u32 %v855, 4294901760
        %857 = vmatmul.mubr.f32.gmra.mxu0 %v856
        %v858 = vpop.f32.mrf.mxu0
        %v859 = vadd.f32 %v745, %v858
        %v860 = vpop.f32.mrf.mxu0
        %v861 = vadd.f32 %v747, %v860
        %862 = vmatprep.mubr.f32.mxu0 0.0
        %v863 = vand.u32 %v209, 4294901760
        %v864 = vsub.f32 %v209, %v863
        %v865 = vand.u32 %v864, 4294901760
        %866 = vmatmul.mubr.f32.gmra.mxu0 %v865
        %v867 = vpop.f32.mrf.mxu0
        %v868 = vadd.f32 %v753, %v867
        %v869 = vpop.f32.mrf.mxu0
        %v870 = vadd.f32 %v755, %v869
        %871 = vdwg.mxu0
        %v872 = vand.u32 %v241, 4294901760
        %v873 = vsub.f32 %v241, %v872
        %v874 = vand.u32 %v873, 4294901760
        %875 = vmatprep.subr.mxu0 %v874
        %v876 = vand.u32 %v240, 4294901760
        %v877 = vsub.f32 %v240, %v876
        %v878 = vand.u32 %v877, 4294901760
        %879 = vmatpush1.msra.mxu0 %v878
        %v880 = vand.u32 %v239, 4294901760
        %v881 = vsub.f32 %v239, %v880
        %v882 = vand.u32 %v881, 4294901760
        %883 = vmatprep.subr.mxu0 %v882
        %v884 = vand.u32 %v238, 4294901760
        %v885 = vsub.f32 %v238, %v884
        %v886 = vand.u32 %v885, 4294901760
        %887 = vmatpush1.msra.mxu0 %v886
        %v888 = vand.u32 %v237, 4294901760
        %v889 = vsub.f32 %v237, %v888
        %v890 = vand.u32 %v889, 4294901760
        %891 = vmatprep.subr.mxu0 %v890
        %v892 = vand.u32 %v236, 4294901760
        %v893 = vsub.f32 %v236, %v892
        %v894 = vand.u32 %v893, 4294901760
        %895 = vmatpush1.msra.mxu0 %v894
        %v896 = vand.u32 %v235, 4294901760
        %v897 = vsub.f32 %v235, %v896
        %v898 = vand.u32 %v897, 4294901760
        %899 = vmatprep.subr.mxu0 %v898
        %v900 = vand.u32 %v234, 4294901760
        %v901 = vsub.f32 %v234, %v900
        %v902 = vand.u32 %v901, 4294901760
        %903 = vmatpush1.msra.mxu0 %v902
        %v904 = vand.u32 %v233, 4294901760
        %v905 = vsub.f32 %v233, %v904
        %v906 = vand.u32 %v905, 4294901760
        %907 = vmatprep.subr.mxu0 %v906
        %v908 = vand.u32 %v232, 4294901760
        %v909 = vsub.f32 %v232, %v908
        %v910 = vand.u32 %v909, 4294901760
        %911 = vmatpush1.msra.mxu0 %v910
        %v912 = vand.u32 %v231, 4294901760
        %v913 = vsub.f32 %v231, %v912
        %v914 = vand.u32 %v913, 4294901760
        %915 = vmatprep.subr.mxu0 %v914
        %v916 = vand.u32 %v230, 4294901760
        %v917 = vsub.f32 %v230, %v916
        %v918 = vand.u32 %v917, 4294901760
        %919 = vmatpush1.msra.mxu0 %v918
        %v920 = vand.u32 %v229, 4294901760
        %v921 = vsub.f32 %v229, %v920
        %v922 = vand.u32 %v921, 4294901760
        %923 = vmatprep.subr.mxu0 %v922
        %v924 = vand.u32 %v228, 4294901760
        %v925 = vsub.f32 %v228, %v924
        %v926 = vand.u32 %v925, 4294901760
        %927 = vmatpush1.msra.mxu0 %v926
        %v928 = vand.u32 %v227, 4294901760
        %v929 = vsub.f32 %v227, %v928
        %v930 = vand.u32 %v929, 4294901760
        %931 = vmatprep.subr.mxu0 %v930
        %v932 = vand.u32 %v226, 4294901760
        %v933 = vsub.f32 %v226, %v932
        %v934 = vand.u32 %v933, 4294901760
        %935 = vmatpush1.msra.mxu0 %v934
        %v936 = vand.u32 %v225, 4294901760
        %v937 = vsub.f32 %v225, %v936
        %v938 = vand.u32 %v937, 4294901760
        %939 = vmatprep.subr.mxu0 %v938
        %v940 = vand.u32 %v224, 4294901760
        %v941 = vsub.f32 %v224, %v940
        %v942 = vand.u32 %v941, 4294901760
        %943 = vmatpush1.msra.mxu0 %v942
        %v944 = vand.u32 %v223, 4294901760
        %v945 = vsub.f32 %v223, %v944
        %v946 = vand.u32 %v945, 4294901760
        %947 = vmatprep.subr.mxu0 %v946
        %v948 = vand.u32 %v222, 4294901760
        %v949 = vsub.f32 %v222, %v948
        %v950 = vand.u32 %v949, 4294901760
        %951 = vmatpush1.msra.mxu0 %v950
        %v952 = vand.u32 %v221, 4294901760
        %v953 = vsub.f32 %v221, %v952
        %v954 = vand.u32 %v953, 4294901760
        %955 = vmatprep.subr.mxu0 %v954
        %v956 = vand.u32 %v220, 4294901760
        %v957 = vsub.f32 %v220, %v956
        %v958 = vand.u32 %v957, 4294901760
        %959 = vmatpush1.msra.mxu0 %v958
        %v960 = vand.u32 %v219, 4294901760
        %v961 = vsub.f32 %v219, %v960
        %v962 = vand.u32 %v961, 4294901760
        %963 = vmatprep.subr.mxu0 %v962
        %v964 = vand.u32 %v218, 4294901760
        %v965 = vsub.f32 %v218, %v964
        %v966 = vand.u32 %v965, 4294901760
        %967 = vmatpush1.msra.mxu0 %v966
        %v968 = vand.u32 %v217, 4294901760
        %v969 = vsub.f32 %v217, %v968
        %v970 = vand.u32 %v969, 4294901760
        %971 = vmatprep.subr.mxu0 %v970
        %v972 = vand.u32 %v216, 4294901760
        %v973 = vsub.f32 %v216, %v972
        %v974 = vand.u32 %v973, 4294901760
        %975 = vmatpush1.msra.mxu0 %v974
        %v976 = vand.u32 %v215, 4294901760
        %v977 = vsub.f32 %v215, %v976
        %v978 = vand.u32 %v977, 4294901760
        %979 = vmatprep.subr.mxu0 %v978
        %v980 = vand.u32 %v214, 4294901760
        %v981 = vsub.f32 %v214, %v980
        %v982 = vand.u32 %v981, 4294901760
        %983 = vmatpush1.msra.mxu0 %v982
        %v984 = vand.u32 %v213, 4294901760
        %v985 = vsub.f32 %v213, %v984
        %v986 = vand.u32 %v985, 4294901760
        %987 = vmatprep.subr.mxu0 %v986
        %v988 = vand.u32 %v212, 4294901760
        %v989 = vsub.f32 %v212, %v988
        %v990 = vand.u32 %v989, 4294901760
        %991 = vmatpush1.msra.mxu0 %v990
        %v992 = vand.u32 %v211, 4294901760
        %v993 = vsub.f32 %v211, %v992
        %v994 = vand.u32 %v993, 4294901760
        %995 = vmatprep.subr.mxu0 %v994
        %v996 = vand.u32 %v210, 4294901760
        %v997 = vsub.f32 %v210, %v996
        %v998 = vand.u32 %v997, 4294901760
        %999 = vmatpush1.msra.mxu0 %v998
        %1000 = vmatprep.subr.mxu0 0.0
        %1001 = vmatpush2.msra.mxu0 0.0
        %1002 = vmatprep.subr.mxu0 0.0
        %1003 = vmatpush2.msra.mxu0 0.0
        %1004 = vmatprep.subr.mxu0 0.0
        %1005 = vmatpush2.msra.mxu0 0.0
        %1006 = vmatprep.subr.mxu0 0.0
        %1007 = vmatpush2.msra.mxu0 0.0
        %1008 = vmatprep.subr.mxu0 0.0
        %1009 = vmatpush2.msra.mxu0 0.0
        %1010 = vmatprep.subr.mxu0 0.0
        %1011 = vmatpush2.msra.mxu0 0.0
        %1012 = vmatprep.subr.mxu0 0.0
        %1013 = vmatpush2.msra.mxu0 0.0
        %1014 = vmatprep.subr.mxu0 0.0
        %1015 = vmatpush2.msra.mxu0 0.0
        %1016 = vmatprep.subr.mxu0 0.0
        %1017 = vmatpush2.msra.mxu0 0.0
        %1018 = vmatprep.subr.mxu0 0.0
        %1019 = vmatpush2.msra.mxu0 0.0
        %1020 = vmatprep.subr.mxu0 0.0
        %1021 = vmatpush2.msra.mxu0 0.0
        %1022 = vmatprep.subr.mxu0 0.0
        %1023 = vmatpush2.msra.mxu0 0.0
        %1024 = vmatprep.subr.mxu0 0.0
        %1025 = vmatpush2.msra.mxu0 0.0
        %1026 = vmatprep.subr.mxu0 0.0
        %1027 = vmatpush2.msra.mxu0 0.0
        %1028 = vmatprep.subr.mxu0 0.0
        %1029 = vmatpush2.msra.mxu0 0.0
        %1030 = vmatprep.subr.mxu0 0.0
        %1031 = vmatpush2.msra.mxu0 0.0
        %1032 = vmatprep.mubr.f32.mxu0 0.0
        %v1033 = vand.u32 %v208, 4294901760
        %1034 = vmatmul.mubr.f32.gmra.mxu0 %v1033
        %v1035 = vpop.f32.mrf.mxu0
        %v1036 = vadd.f32 %v859, %v1035
        %v1037 = vpop.f32.mrf.mxu0
        %v1038 = vadd.f32 %v861, %v1037
        %1039 = vmatprep.mubr.f32.mxu0 0.0
        %v1040 = vand.u32 %v209, 4294901760
        %1041 = vmatmul.mubr.f32.gmra.mxu0 %v1040
        %v1042 = vpop.f32.mrf.mxu0
        %v1043 = vadd.f32 %v868, %v1042
        %v1044 = vpop.f32.mrf.mxu0
        %v1045 = vadd.f32 %v870, %v1044
        %1046 = vdwg.mxu0
        %v1047 = vand.u32 %v241, 4294901760
        %1048 = vmatprep.subr.mxu0 %v1047
        %v1049 = vand.u32 %v240, 4294901760
        %1050 = vmatpush1.msra.mxu0 %v1049
        %v1051 = vand.u32 %v239, 4294901760
        %1052 = vmatprep.subr.mxu0 %v1051
        %v1053 = vand.u32 %v238, 4294901760
        %1054 = vmatpush1.msra.mxu0 %v1053
        %v1055 = vand.u32 %v237, 4294901760
        %1056 = vmatprep.subr.mxu0 %v1055
        %v1057 = vand.u32 %v236, 4294901760
        %1058 = vmatpush1.msra.mxu0 %v1057
        %v1059 = vand.u32 %v235, 4294901760
        %1060 = vmatprep.subr.mxu0 %v1059
        %v1061 = vand.u32 %v234, 4294901760
        %1062 = vmatpush1.msra.mxu0 %v1061
        %v1063 = vand.u32 %v233, 4294901760
        %1064 = vmatprep.subr.mxu0 %v1063
        %v1065 = vand.u32 %v232, 4294901760
        %1066 = vmatpush1.msra.mxu0 %v1065
        %v1067 = vand.u32 %v231, 4294901760
        %1068 = vmatprep.subr.mxu0 %v1067
        %v1069 = vand.u32 %v230, 4294901760
        %1070 = vmatpush1.msra.mxu0 %v1069
        %v1071 = vand.u32 %v229, 4294901760
        %1072 = vmatprep.subr.mxu0 %v1071
        %v1073 = vand.u32 %v228, 4294901760
        %1074 = vmatpush1.msra.mxu0 %v1073
        %v1075 = vand.u32 %v227, 4294901760
        %1076 = vmatprep.subr.mxu0 %v1075
        %v1077 = vand.u32 %v226, 4294901760
        %1078 = vmatpush1.msra.mxu0 %v1077
        %v1079 = vand.u32 %v225, 4294901760
        %1080 = vmatprep.subr.mxu0 %v1079
        %v1081 = vand.u32 %v224, 4294901760
        %1082 = vmatpush1.msra.mxu0 %v1081
        %v1083 = vand.u32 %v223, 4294901760
        %1084 = vmatprep.subr.mxu0 %v1083
        %v1085 = vand.u32 %v222, 4294901760
        %1086 = vmatpush1.msra.mxu0 %v1085
        %v1087 = vand.u32 %v221, 4294901760
        %1088 = vmatprep.subr.mxu0 %v1087
        %v1089 = vand.u32 %v220, 4294901760
        %1090 = vmatpush1.msra.mxu0 %v1089
        %v1091 = vand.u32 %v219, 4294901760
        %1092 = vmatprep.subr.mxu0 %v1091
        %v1093 = vand.u32 %v218, 4294901760
        %1094 = vmatpush1.msra.mxu0 %v1093
        %v1095 = vand.u32 %v217, 4294901760
        %1096 = vmatprep.subr.mxu0 %v1095
        %v1097 = vand.u32 %v216, 4294901760
        %1098 = vmatpush1.msra.mxu0 %v1097
        %v1099 = vand.u32 %v215, 4294901760
        %1100 = vmatprep.subr.mxu0 %v1099
        %v1101 = vand.u32 %v214, 4294901760
        %1102 = vmatpush1.msra.mxu0 %v1101
        %v1103 = vand.u32 %v213, 4294901760
        %1104 = vmatprep.subr.mxu0 %v1103
        %v1105 = vand.u32 %v212, 4294901760
        %1106 = vmatpush1.msra.mxu0 %v1105
        %v1107 = vand.u32 %v211, 4294901760
        %1108 = vmatprep.subr.mxu0 %v1107
        %v1109 = vand.u32 %v210, 4294901760
        %1110 = vmatpush1.msra.mxu0 %v1109
        %1111 = vmatprep.subr.mxu0 0.0
        %1112 = vmatpush2.msra.mxu0 0.0
        %1113 = vmatprep.subr.mxu0 0.0
        %1114 = vmatpush2.msra.mxu0 0.0
        %1115 = vmatprep.subr.mxu0 0.0
        %1116 = vmatpush2.msra.mxu0 0.0
        %1117 = vmatprep.subr.mxu0 0.0
        %1118 = vmatpush2.msra.mxu0 0.0
        %1119 = vmatprep.subr.mxu0 0.0
        %1120 = vmatpush2.msra.mxu0 0.0
        %1121 = vmatprep.subr.mxu0 0.0
        %1122 = vmatpush2.msra.mxu0 0.0
        %1123 = vmatprep.subr.mxu0 0.0
        %1124 = vmatpush2.msra.mxu0 0.0
        %1125 = vmatprep.subr.mxu0 0.0
        %1126 = vmatpush2.msra.mxu0 0.0
        %1127 = vmatprep.subr.mxu0 0.0
        %1128 = vmatpush2.msra.mxu0 0.0
        %1129 = vmatprep.subr.mxu0 0.0
        %1130 = vmatpush2.msra.mxu0 0.0
        %1131 = vmatprep.subr.mxu0 0.0
        %1132 = vmatpush2.msra.mxu0 0.0
        %1133 = vmatprep.subr.mxu0 0.0
        %1134 = vmatpush2.msra.mxu0 0.0
        %1135 = vmatprep.subr.mxu0 0.0
        %1136 = vmatpush2.msra.mxu0 0.0
        %1137 = vmatprep.subr.mxu0 0.0
        %1138 = vmatpush2.msra.mxu0 0.0
        %1139 = vmatprep.subr.mxu0 0.0
        %1140 = vmatpush2.msra.mxu0 0.0
        %1141 = vmatprep.subr.mxu0 0.0
        %1142 = vmatpush2.msra.mxu0 0.0
        %1143 = vmatprep.mubr.f32.mxu0 0.0
        %v1144 = vand.u32 %v208, 4294901760
        %1145 = vmatmul.mubr.f32.gmra.mxu0 %v1144
        %v1146 = vpop.f32.mrf.mxu0
        %v1147 = vadd.f32 %v1036, %v1146
        %v1148 = vpop.f32.mrf.mxu0
        %v1149 = vadd.f32 %v1038, %v1148
        %1150 = vmatprep.mubr.f32.mxu0 0.0
        %v1151 = vand.u32 %v209, 4294901760
        %1152 = vmatmul.mubr.f32.gmra.mxu0 %v1151
        %v1153 = vpop.f32.mrf.mxu0
        %v1154 = vadd.f32 %v1043, %v1153
        %v1155 = vpop.f32.mrf.mxu0
        %v1156 = vadd.f32 %v1045, %v1155
        %1157 = vdwg.mxu0
        %1158 = vst [vmem:[%s203] sm:$0xff] %v1147
        %1159 = vst [vmem:[%s203 + $0x8] sm:$0xff] %v1149
        %1160 = vst [vmem:[%s203 + $0x10] sm:$0xff] %v1154
        %1161 = vst [vmem:[%s203 + $0x18] sm:$0xff] %v1156
        %s1162 = sand.u32 %s97, 1
        %s1163 = scalar_lea.sflag [#allocation4], %s1162
        %s1164 = sand.u32 %s97, 1
        %s1165 = smul.addr %s1164, 32
        %s1166 = scalar_lea.vmem [#allocation7], %s1165
        // Predicated region
        $region41: #{tpu_custom_call.1} parent=31 // pred_check
          %p1167 = pneg %p107
        $region42: #{tpu_custom_call.1} parent=31 // pred_check_branch
          %1169 = sbr.rel (%p1167) target = $region44
        $region43: #{tpu_custom_call.1} parent=31 // pred_region
          %s1170 = smul.u32 2, %s21
          %s1172 = ssub.s32 512, 512
          %1173 = vsyncadd %s1163, %s1172
          %s1174 = smul.addr %s1170, 2
          %s1175 = smul.addr %s1174, 128
          %s1176 = scalar_lea.hbm %s3, %s1175
          %s1177 = sshll.u32 %s1166, 4
          %s1178 = int_to_ptr.vmem [resolvable:$true] %s1177
          %1183 = dma.vmem_to_hbm [thread:$0]  %s1178, 512, %s1176, %s1163, 256, 256, 16
        $region44: #{tpu_custom_call.1} parent=31 // pred_fallthru
          _
      $region32: #{tpu_custom_call.1} parent=5 // pred_fallthru
        _
      %p1184 = scmp.le.s32.totalorder 2, %s16
      // Predicated region
      $region45: #{tpu_custom_call.1} parent=5 // pred_check
        %p1185 = pneg %p1184
      $region46: #{tpu_custom_call.1} parent=5 // pred_check_branch
        %1187 = sbr.rel (%p1185) target = $region48
      $region47: #{tpu_custom_call.1} parent=5 // pred_region
        %s1188 = ssub.s32 %s16, 2
        // Predicated region
        $region49: #{tpu_custom_call.1} parent=47 // pred_check
          %p1189 = pneg %p113
        $region50: #{tpu_custom_call.1} parent=47 // pred_check_branch
          %1191 = sbr.rel (%p1189) target = $region52
        $region51: #{tpu_custom_call.1} parent=47 // pred_region
          %s1192 = sand.u32 %s98, 1
          %s1193 = scalar_lea.sflag [#allocation4], %s1192
          %s1194 = sand.u32 %s98, 1
          %s1195 = smul.addr %s1194, 32
          %s1196 = scalar_lea.vmem [#allocation7], %s1195
          %1197 = dma.done %s1193, 512
        $region52: #{tpu_custom_call.1} parent=47 // pred_fallthru
          _
      $region48: #{tpu_custom_call.1} parent=5 // pred_fallthru
        _
    $region6: #{tpu_custom_call.1} parent=1 // loop_footer
      %s20 = sadd.s32 1, %s16
    $region7: #{tpu_custom_call.1} parent=1 // loop_footer_branch
      %15 = sbr.rel target = $region3
    $region8: #{tpu_custom_call.1} parent=1 // loop_exit
      _
    %1198 = vsyncpa [#allocation3], 1
    %s1199 = scalar_lea.sflag [#allocation3], 1
    %1200 = vsyncpa %s1199, 1
    %1201 = vsyncpa [#allocation6], 1
    %1202 = vsyncpa [#allocation4], 1
    %s1203 = scalar_lea.sflag [#allocation4], 1
    %1204 = vsyncpa %s1203, 1

// kernel: tpu_custom_call.1
$region0: #{tpu_custom_call.1}
  #allocation0 [shape = 'u32[]', space=smem, size = 0x4, offset = 0x4, fixed_abs, tag = 'smem constant byte address 0x4 - core index']
  #allocation1 [shape = 'u32[144,128]{1,0:T(1,128)}', space=vmem, size = 0x12000, scoped, tag = 'internal scratch']
  %s0 = inlined_call_operand.hbm [shape: f32[32,128], index: 0, kind: input, shape index: {}]
  %s1 = inlined_call_operand.hbm [shape: f32[128,256], index: 1, kind: input, shape index: {}]
  %s2 = inlined_call_operand.vmem [shape: f32[1,256], index: 2, kind: input, shape index: {}]
  %s3 = inlined_call_operand.hbm [shape: f32[32,256], index: 3, kind: output, shape index: {}]
  %s4 = sld [smem:[#allocation0]]
  $region53: #{tpu_custom_call.1} parent=0
    _
  %s6 = ssub.s32 1, %s4
  %s7 = scalar_select 0, %s6, %s4
  $region1: #{tpu_custom_call.1} parent=0
    #allocation2 [shape = 'u8[16384]{0}', space=vmem, size = 0x4000, scoped, tag = 'input window, operand 0']
    #allocation3 [shape = 's32[2]{0}', space=sflag, size = 0x8, scoped, tag = 'scoped memory for tpu_custom_call.1']
    #allocation4 [shape = 's32[2]{0}', space=sflag, size = 0x8, scoped, tag = 'scoped memory for tpu_custom_call.1']
    #allocation5 [shape = 'u8[131072]{0}', space=vmem, size = 0x20000, scoped, tag = 'input window, operand 1, single buffered']
    #allocation6 [shape = 's32[1]{0}', space=sflag, size = 0x4, scoped, tag = 'scoped memory for tpu_custom_call.1']
    #allocation7 [shape = 'u8[32768]{0}', space=vmem, size = 0x8000, scoped, tag = 'output window, operand 0']
    %8 = vsyncpa [#allocation3], 0
    %s9 = scalar_lea.sflag [#allocation3], 1
    %10 = vsyncpa %s9, 0
    %11 = vsyncpa [#allocation6], 0
    %12 = vsyncpa [#allocation4], 0
    %s13 = scalar_lea.sflag [#allocation4], 1
    %14 = vsyncpa %s13, 0
    loop: start=0, step=1, limit=4
    $region2: #{tpu_custom_call.1} parent=1 // loop_pre_header
      _
    $region3: #{tpu_custom_call.1} parent=1 // loop_header
      %s16 = sphi 0, %s20
      %p17 = scmp.ge.s32.totalorder %s16, 4
      %s26 = sphi 0, %s28
      %s29 = sphi 0, %s26
      %s30 = sphi 0, %s29
      %s46 = sphi 0, %s30
      %s50 = sphi 0, %s50
      %s52 = sphi 0, %s50
      %s53 = sphi 0, %s52
      %s67 = sphi 0, %s53
      %s71 = sphi 0, %s71
      %s73 = sphi 0, %s71
      %s74 = sphi 0, %s73
      %s88 = sphi 0, %s74
      %s94 = sphi 0, %s96
      %s97 = sphi 0, %s94
      %s98 = sphi 0, %s97
      %s114 = sphi 0, %s98
    $region4: #{tpu_custom_call.1} parent=1 // loop_header_branch
      %19 = sbr.rel (%p17) target = $region8
    $region5: #{tpu_custom_call.1} parent=1 // loop_body
      %s21 = ssub.s32 %s16, 1
      %s22 = ssub.s32 %s16, 2
      %s23 = sadd.s32 %s16, 1
      %s24 = ssub.s32 %s16, %s23
      %p25 = scmp.eq.s32.totalorder %s24, 0
      %s27 = sadd.s32 %s26, 1
      %s28 = scalar_select %p25, %s26, %s27
      %p31 = pneg %p25
      %p32 = scmp.eq.s32.totalorder %s16, 1
      %p33 = por %p31, %p32
      %p34 = scmp.ne.s32.totalorder %s26, %s29
      %p35 = scmp.eq.s32.totalorder %s16, 0
      %p36 = por %p34, %p35
      %p37 = scmp.ne.s32.totalorder %s26, %s29
      %p38 = scmp.eq.s32.totalorder %s21, 1
      %p39 = por %p37, %p38
      %p40 = scmp.ne.s32.totalorder %s29, %s30
      %p41 = scmp.eq.s32.totalorder %s21, 0
      %p42 = por %p40, %p41
      %p43 = scmp.ne.s32.totalorder %s29, %s30
      %p44 = scmp.eq.s32.totalorder %s22, 1
      %p45 = por %p43, %p44
      %p47 = scmp.ne.s32.totalorder %s30, %s46
      %p48 = scmp.eq.s32.totalorder %s22, 0
      %p49 = por %p47, %p48
      %s51 = sadd.s32 %s50, 1
      %p54 = scmp.eq.s32.totalorder %s16, 1
      %p55 = scmp.ne.s32.totalorder %s50, %s52
      %p56 = scmp.eq.s32.totalorder %s16, 0
      %p57 = por %p55, %p56
      %p58 = scmp.ne.s32.totalorder %s50, %s52
      %p59 = scmp.eq.s32.totalorder %s21, 1
      %p60 = por %p58, %p59
      %p61 = scmp.ne.s32.totalorder %s52, %s53
      %p62 = scmp.eq.s32.totalorder %s21, 0
      %p63 = por %p61, %p62
      %p64 = scmp.ne.s32.totalorder %s52, %s53
      %p65 = scmp.eq.s32.totalorder %s22, 1
      %p66 = por %p64, %p65
      %p68 = scmp.ne.s32.totalorder %s53, %s67
      %p69 = scmp.eq.s32.totalorder %s22, 0
      %p70 = por %p68, %p69
      %s72 = sadd.s32 %s71, 1
      %p75 = scmp.eq.s32.totalorder %s16, 1
      %p76 = scmp.ne.s32.totalorder %s71, %s73
      %p77 = scmp.eq.s32.totalorder %s16, 0
      %p78 = por %p76, %p77
      %p79 = scmp.ne.s32.totalorder %s71, %s73
      %p80 = scmp.eq.s32.totalorder %s21, 1
      %p81 = por %p79, %p80
      %p82 = scmp.ne.s32.totalorder %s73, %s74
      %p83 = scmp.eq.s32.totalorder %s21, 0
      %p84 = por %p82, %p83
      %p85 = scmp.ne.s32.totalorder %s73, %s74
      %p86 = scmp.eq.s32.totalorder %s22, 1
      %p87 = por %p85, %p86
      %p89 = scmp.ne.s32.totalorder %s74, %s88
      %p90 = scmp.eq.s32.totalorder %s22, 0
      %p91 = por %p89, %p90
      %s92 = ssub.s32 %s16, %s23
      %p93 = scmp.eq.s32.totalorder %s92, 0
      %s95 = sadd.s32 %s94, 1
      %s96 = scalar_select %p93, %s94, %s95
      %p99 = pneg %p93
      %p100 = scmp.eq.s32.totalorder %s16, 1
      %p101 = por %p99, %p100
      %p102 = scmp.ne.s32.totalorder %s94, %s97
      %p103 = scmp.eq.s32.totalorder %s16, 0
      %p104 = por %p102, %p103
      %p105 = scmp.ne.s32.totalorder %s94, %s97
      %p106 = scmp.eq.s32.totalorder %s21, 1
      %p107 = por %p105, %p106
      %p108 = scmp.ne.s32.totalorder %s97, %s98
      %p109 = scmp.eq.s32.totalorder %s21, 0
      %p110 = por %p108, %p109
      %p111 = scmp.ne.s32.totalorder %s97, %s98
      %p112 = scmp.eq.s32.totalorder %s22, 1
      %p113 = por %p111, %p112
      %p115 = scmp.ne.s32.totalorder %s98, %s114
      %p116 = scmp.eq.s32.totalorder %s22, 0
      %p117 = por %p115, %p116
      %p118 = scmp.le.s32.totalorder 1, %s16
      %p119 = scmp.lt.s32.totalorder %s16, 3
      %p120 = pnand %p118, %p119
      %p121 = pneg %p120
      // Predicated region
      $region9: #{tpu_custom_call.1} parent=5 // pred_check
        _
      $region10: #{tpu_custom_call.1} parent=5 // pred_check_branch
        %123 = sbr.rel (%p120) target = $region12
      $region11: #{tpu_custom_call.1} parent=5 // pred_region
        %s124 = ssub.s32 %s16, 1
        // Predicated region
        $region13: #{tpu_custom_call.1} parent=11 // pred_check
          %p125 = pneg %p63
        $region14: #{tpu_custom_call.1} parent=11 // pred_check_branch
          %127 = sbr.rel (%p125) target = $region16
        $region15: #{tpu_custom_call.1} parent=11 // pred_region
          %s129 = ssub.s32 4096, 4096
          %130 = vsyncadd [#allocation6], %s129
          %s131 = sshll.u32 [#allocation5], 4
          %s132 = int_to_ptr.vmem [resolvable:$true] %s131
          %137 = dma.hbm_to_vmem [thread:$0]  %s1, 4096, %s132, [#allocation6], 256, 256, 16
        $region16: #{tpu_custom_call.1} parent=11 // pred_fallthru
          _
        // Predicated region
        $region17: #{tpu_custom_call.1} parent=11 // pred_check
          %p138 = pneg %p84
        $region18: #{tpu_custom_call.1} parent=11 // pred_check_branch
          %140 = sbr.rel (%p138) target = $region20
        $region19: #{tpu_custom_call.1} parent=11 // pred_region
          _
        $region20: #{tpu_custom_call.1} parent=11 // pred_fallthru
          _
      $region12: #{tpu_custom_call.1} parent=5 // pred_fallthru
        _
      %p141 = scmp.lt.s32.totalorder %s16, 2
      // Predicated region
      $region21: #{tpu_custom_call.1} parent=5 // pred_check
        %p142 = pneg %p141
      $region22: #{tpu_custom_call.1} parent=5 // pred_check_branch
        %144 = sbr.rel (%p142) target = $region24
      $region23: #{tpu_custom_call.1} parent=5 // pred_region
        // Predicated region
        $region25: #{tpu_custom_call.1} parent=23 // pred_check
          %p145 = pneg %p36
        $region26: #{tpu_custom_call.1} parent=23 // pred_check_branch
          %147 = sbr.rel (%p145) target = $region28
        $region27: #{tpu_custom_call.1} parent=23 // pred_region
          %s148 = sand.u32 %s26, 1
          %s149 = scalar_lea.sflag [#allocation3], %s148
          %s150 = sand.u32 %s26, 1
          %s151 = smul.addr %s150, 16
          %s152 = scalar_lea.vmem [#allocation2], %s151
          %s153 = smul.u32 2, %s16
          %s155 = ssub.s32 256, 256
          %156 = vsyncadd %s149, %s155
          %s157 = smul.addr %s153, 128
          %s158 = scalar_lea.hbm %s0, %s157
          %s159 = sshll.u32 %s152, 4
          %s160 = int_to_ptr.vmem [resolvable:$true] %s159
          %165 = dma.hbm_to_vmem [thread:$0]  %s158, 256, %s160, %s149, 128, 128, 8
        $region28: #{tpu_custom_call.1} parent=23 // pred_fallthru
          _
      $region24: #{tpu_custom_call.1} parent=5 // pred_fallthru
        _
      %p166 = scmp.le.s32.totalorder 1, %s16
      %p167 = scmp.lt.s32.totalorder %s16, 3
      %p168 = pnand %p166, %p167
      %p169 = pneg %p168
      // Predicated region
      $region29: #{tpu_custom_call.1} parent=5 // pred_check
        _
      $region30: #{tpu_custom_call.1} parent=5 // pred_check_branch
        %171 = sbr.rel (%p168) target = $region32
      $region31: #{tpu_custom_call.1} parent=5 // pred_region
        %s172 = ssub.s32 %s16, 1
        %s173 = sand.u32 %s29, 1
        %s174 = scalar_lea.sflag [#allocation3], %s173
        %s175 = sand.u32 %s29, 1
        %s176 = smul.addr %s175, 16
        %s177 = scalar_lea.vmem [#allocation2], %s176
        // Predicated region
        $region33: #{tpu_custom_call.1} parent=31 // pred_check
          %p178 = pneg %p42
        $region34: #{tpu_custom_call.1} parent=31 // pred_check_branch
          %180 = sbr.rel (%p178) target = $region36
        $region35: #{tpu_custom_call.1} parent=31 // pred_region
          %181 = dma.done %s174, 256
        $region36: #{tpu_custom_call.1} parent=31 // pred_fallthru
          _
        // Predicated region
        $region37: #{tpu_custom_call.1} parent=31 // pred_check
          %p182 = pneg %p63
        $region38: #{tpu_custom_call.1} parent=31 // pred_check_branch
          %184 = sbr.rel (%p182) target = $region40
        $region39: #{tpu_custom_call.1} parent=31 // pred_region
          %185 = dma.done [#allocation6], 4096
        $region40: #{tpu_custom_call.1} parent=31 // pred_fallthru
          _
        %s186 = sand.u32 %s29, 1
        %s187 = scalar_lea.sflag [#allocation3], %s186
        %s188 = sand.u32 %s29, 1
        %s189 = smul.addr %s188, 16
        %s190 = scalar_lea.vmem [#allocation2], %s189
        %p191 = pneg %p42
        %p192 = pneg %p39
        %p193 = pneg %p63
        %p194 = pneg %p60
        %p195 = pneg %p84
        %p196 = pneg %p81
        %p197 = pneg %p110
        %p198 = pneg %p107
        %s199 = sand.u32 %s97, 1
        %s200 = scalar_lea.sflag [#allocation4], %s199
        %s201 = sand.u32 %s97, 1
        %s202 = smul.addr %s201, 32
        %s203 = scalar_lea.vmem [#allocation7], %s202
        %s204 = smul.u32 2, %s21
        %s205 = smul.u32 2, %s21
        %v206 = vld [vmem:[%s177] sm:$0xff]
        %v207 = vld [vmem:[%s177 + $0x8] sm:$0xff]
        %v208 = vmax.f32 %v206, 0.0
        %v209 = vmax.f32 %v207, 0.0
        %v210 = vld [vmem:[#allocation5] sm:$0xff]
        %v211 = vld [vmem:[#allocation5 + $0x8] sm:$0xff]
        %v212 = vld [vmem:[#allocation5 + $0x10] sm:$0xff]
        %v213 = vld [vmem:[#allocation5 + $0x18] sm:$0xff]
        %v214 = vld [vmem:[#allocation5 + $0x20] sm:$0xff]
        %v215 = vld [vmem:[#allocation5 + $0x28] sm:$0xff]
        %v216 = vld [vmem:[#allocation5 + $0x30] sm:$0xff]
        %v217 = vld [vmem:[#allocation5 + $0x38] sm:$0xff]
        %v218 = vld [vmem:[#allocation5 + $0x40] sm:$0xff]
        %v219 = vld [vmem:[#allocation5 + $0x48] sm:$0xff]
        %v220 = vld [vmem:[#allocation5 + $0x50] sm:$0xff]
        %v221 = vld [vmem:[#allocation5 + $0x58] sm:$0xff]
        %v222 = vld [vmem:[#allocation5 + $0x60] sm:$0xff]
        %v223 = vld [vmem:[#allocation5 + $0x68] sm:$0xff]
        %v224 = vld [vmem:[#allocation5 + $0x70] sm:$0xff]
        %v225 = vld [vmem:[#allocation5 + $0x78] sm:$0xff]
        %v226 = vld [vmem:[#allocation5 + $0x80] sm:$0xff]
        %v227 = vld [vmem:[#allocation5 + $0x88] sm:$0xff]
        %v228 = vld [vmem:[#allocation5 + $0x90] sm:$0xff]
        %v229 = vld [vmem:[#allocation5 + $0x98] sm:$0xff]
        %v230 = vld [vmem:[#allocation5 + $0xa0] sm:$0xff]
        %v231 = vld [vmem:[#allocation5 + $0xa8] sm:$0xff]
        %v232 = vld [vmem:[#allocation5 + $0xb0] sm:$0xff]
        %v233 = vld [vmem:[#allocation5 + $0xb8] sm:$0xff]
        %v234 = vld [vmem:[#allocation5 + $0xc0] sm:$0xff]
        %v235 = vld [vmem:[#allocation5 + $0xc8] sm:$0xff]
        %v236 = vld [vmem:[#allocation5 + $0xd0] sm:$0xff]
        %v237 = vld [vmem:[#allocation5 + $0xd8] sm:$0xff]
        %v238 = vld [vmem:[#allocation5 + $0xe0] sm:$0xff]
        %v239 = vld [vmem:[#allocation5 + $0xe8] sm:$0xff]
        %v240 = vld [vmem:[#allocation5 + $0xf0] sm:$0xff]
        %v241 = vld [vmem:[#allocation5 + $0xf8] sm:$0xff]
        %v242 = vld [vmem:[%s2] sm:$0x3]
        %v244 = vlaneseq
        %v245 = vshrl.u32 %v244, 7
        %v246 = vsub.s32 0, %v245
        %v247 = vrot.slane %v242, %v246
        %v248 = vlaneseq
        %v249 = vshrl.u32 %v248, 7
        %v250 = vsub.s32 1, %v249
        %v251 = vrot.slane %v242, %v250
        %254 = vmatprep.subr.mxu0 %v241
        %255 = vmatpush1.msra.mxu0 %v240
        %256 = vmatprep.subr.mxu0 %v239
        %257 = vmatpush1.msra.mxu0 %v238
        %258 = vmatprep.subr.mxu0 %v237
        %259 = vmatpush1.msra.mxu0 %v236
        %260 = vmatprep.subr.mxu0 %v235
        %261 = vmatpush1.msra.mxu0 %v234
        %262 = vmatprep.subr.mxu0 %v233
        %263 = vmatpush1.msra.mxu0 %v232
        %264 = vmatprep.subr.mxu0 %v231
        %265 = vmatpush1.msra.mxu0 %v230
        %266 = vmatprep.subr.mxu0 %v229
        %267 = vmatpush1.msra.mxu0 %v228
        %268 = vmatprep.subr.mxu0 %v227
        %269 = vmatpush1.msra.mxu0 %v226
        %270 = vmatprep.subr.mxu0 %v225
        %271 = vmatpush1.msra.mxu0 %v224
        %272 = vmatprep.subr.mxu0 %v223
        %273 = vmatpush1.msra.mxu0 %v222
        %274 = vmatprep.subr.mxu0 %v221
        %275 = vmatpush1.msra.mxu0 %v220
        %276 = vmatprep.subr.mxu0 %v219
        %277 = vmatpush1.msra.mxu0 %v218
        %278 = vmatprep.subr.mxu0 %v217
        %279 = vmatpush1.msra.mxu0 %v216
        %280 = vmatprep.subr.mxu0 %v215
        %281 = vmatpush1.msra.mxu0 %v214
        %282 = vmatprep.subr.mxu0 %v213
        %283 = vmatpush1.msra.mxu0 %v212
        %284 = vmatprep.subr.mxu0 %v211
        %285 = vmatpush1.msra.mxu0 %v210
        %286 = vmatprep.subr.mxu0 0.0
        %287 = vmatpush2.msra.mxu0 0.0
        %288 = vmatprep.subr.mxu0 0.0
        %289 = vmatpush2.msra.mxu0 0.0
        %290 = vmatprep.subr.mxu0 0.0
        %291 = vmatpush2.msra.mxu0 0.0
        %292 = vmatprep.subr.mxu0 0.0
        %293 = vmatpush2.msra.mxu0 0.0
        %294 = vmatprep.subr.mxu0 0.0
        %295 = vmatpush2.msra.mxu0 0.0
        %296 = vmatprep.subr.mxu0 0.0
        %297 = vmatpush2.msra.mxu0 0.0
        %298 = vmatprep.subr.mxu0 0.0
        %299 = vmatpush2.msra.mxu0 0.0
        %300 = vmatprep.subr.mxu0 0.0
        %301 = vmatpush2.msra.mxu0 0.0
        %302 = vmatprep.subr.mxu0 0.0
        %303 = vmatpush2.msra.mxu0 0.0
        %304 = vmatprep.subr.mxu0 0.0
        %305 = vmatpush2.msra.mxu0 0.0
        %306 = vmatprep.subr.mxu0 0.0
        %307 = vmatpush2.msra.mxu0 0.0
        %308 = vmatprep.subr.mxu0 0.0
        %309 = vmatpush2.msra.mxu0 0.0
        %310 = vmatprep.subr.mxu0 0.0
        %311 = vmatpush2.msra.mxu0 0.0
        %312 = vmatprep.subr.mxu0 0.0
        %313 = vmatpush2.msra.mxu0 0.0
        %314 = vmatprep.subr.mxu0 0.0
        %315 = vmatpush2.msra.mxu0 0.0
        %316 = vmatprep.subr.mxu0 0.0
        %317 = vmatpush2.msra.mxu0 0.0
        %318 = vmatprep.mubr.f32.mxu0 0.0
        %319 = vmatmul.mubr.f32.gmra.mxu0 %v208
        %v320 = vpop.f32.mrf.mxu0
        %v321 = vadd.f32 %v247, %v320
        %v322 = vpop.f32.mrf.mxu0
        %v323 = vadd.f32 %v251, %v322
        %324 = vmatprep.mubr.f32.mxu0 0.0
        %325 = vmatmul.mubr.f32.gmra.mxu0 %v209
        %v326 = vpop.f32.mrf.mxu0
        %v327 = vadd.f32 %v247, %v326
        %v328 = vpop.f32.mrf.mxu0
        %v329 = vadd.f32 %v251, %v328
        %330 = vdwg.mxu0
        %331 = vst [vmem:[%s203] sm:$0xff] %v321
        %332 = vst [vmem:[%s203 + $0x8] sm:$0xff] %v323
        %333 = vst [vmem:[%s203 + $0x10] sm:$0xff] %v327
        %334 = vst [vmem:[%s203 + $0x18] sm:$0xff] %v329
        %s335 = sand.u32 %s97, 1
        %s336 = scalar_lea.sflag [#allocation4], %s335
        %s337 = sand.u32 %s97, 1
        %s338 = smul.addr %s337, 32
        %s339 = scalar_lea.vmem [#allocation7], %s338
        // Predicated region
        $region41: #{tpu_custom_call.1} parent=31 // pred_check
          %p340 = pneg %p107
        $region42: #{tpu_custom_call.1} parent=31 // pred_check_branch
          %342 = sbr.rel (%p340) target = $region44
        $region43: #{tpu_custom_call.1} parent=31 // pred_region
          %s343 = smul.u32 2, %s21
          %s345 = ssub.s32 512, 512
          %346 = vsyncadd %s336, %s345
          %s347 = smul.addr %s343, 2
          %s348 = smul.addr %s347, 128
          %s349 = scalar_lea.hbm %s3, %s348
          %s350 = sshll.u32 %s339, 4
          %s351 = int_to_ptr.vmem [resolvable:$true] %s350
          %356 = dma.vmem_to_hbm [thread:$0]  %s351, 512, %s349, %s336, 256, 256, 16
        $region44: #{tpu_custom_call.1} parent=31 // pred_fallthru
          _
      $region32: #{tpu_custom_call.1} parent=5 // pred_fallthru
        _
      %p357 = scmp.le.s32.totalorder 2, %s16
      // Predicated region
      $region45: #{tpu_custom_call.1} parent=5 // pred_check
        %p358 = pneg %p357
      $region46: #{tpu_custom_call.1} parent=5 // pred_check_branch
        %360 = sbr.rel (%p358) target = $region48
      $region47: #{tpu_custom_call.1} parent=5 // pred_region
        %s361 = ssub.s32 %s16, 2
        // Predicated region
        $region49: #{tpu_custom_call.1} parent=47 // pred_check
          %p362 = pneg %p113
        $region50: #{tpu_custom_call.1} parent=47 // pred_check_branch
          %364 = sbr.rel (%p362) target = $region52
        $region51: #{tpu_custom_call.1} parent=47 // pred_region
          %s365 = sand.u32 %s98, 1
          %s366 = scalar_lea.sflag [#allocation4], %s365
          %s367 = sand.u32 %s98, 1
          %s368 = smul.addr %s367, 32
          %s369 = scalar_lea.vmem [#allocation7], %s368
          %370 = dma.done %s366, 512
        $region52: #{tpu_custom_call.1} parent=47 // pred_fallthru
          _
      $region48: #{tpu_custom_call.1} parent=5 // pred_fallthru
        _
    $region6: #{tpu_custom_call.1} parent=1 // loop_footer
      %s20 = sadd.s32 1, %s16
    $region7: #{tpu_custom_call.1} parent=1 // loop_footer_branch
      %15 = sbr.rel target = $region3
    $region8: #{tpu_custom_call.1} parent=1 // loop_exit
      _
    %371 = vsyncpa [#allocation3], 1
    %s372 = scalar_lea.sflag [#allocation3], 1
    %373 = vsyncpa %s372, 1
    %374 = vsyncpa [#allocation6], 1
    %375 = vsyncpa [#allocation4], 1
    %s376 = scalar_lea.sflag [#allocation4], 1
    %377 = vsyncpa %s376, 1

</llo_original>
